<compile_context>
chip_gen: v6e
topology: v6e:2x2x1
jax: 0.10.0
libtpu: 0.0.40
codegen_flags: <defaults>
</compile_context>

<pallas_src>
import functools

import numpy as np
import jax
import jax.numpy as jnp
from jax import lax
from jax.experimental import pallas as pl
from jax.experimental.pallas import tpu as pltpu


def _elu(x):
    # F.elu (alpha=1); exp(x)-1 instead of expm1 only for lowering safety.
    return jnp.where(x > 0, x, jnp.exp(x) - 1.0)


# ---------------------------------------------------------------------------
# Kernel 1: per-batch-tile encoder (convs + heads) + partial moments
# ---------------------------------------------------------------------------
def _encoder_tile_kernel(x_ref, w0_ref, b0_ref, wh_ref, bh_ref, wl_ref, bl_ref,
                         y_ref, stats_ref, hp_ref, *, n_hidden):
    """One batch tile of the TurboAE interleaved-CNN encoder (eval mode).

    x_ref    : (TB, L, 3K)      packed raw bits: [sys | interleaved1 | interleaved2]
    w0_ref   : (ks, 3K, Cp)     layer-0 conv taps, block-diag over branches, padded
    b0_ref   : (1, Cp)
    wh_ref   : (nh', ks, Cp, Cp) hidden conv taps, block-diag, padded
    bh_ref   : (nh', 1, Cp)
    wl_ref   : (Cp, 3)          the three Linear(C,1) heads, block-diag
    bl_ref   : (1, 3)
    y_ref    : (TB, L, 3)       un-normalized codes for this tile
    stats_ref: (1, 2, 8, 128)   partial [sum, sum_sq], broadcast over the tile
    hp_ref   : (TB, L+2p, Cp)   persistent padded-activation scratch (VMEM)
    """
    TB, L, CK = x_ref.shape
    ks, _, Cp = w0_ref.shape
    pad = ks // 2
    M = TB * L

    # --- x = 2*inputs - 1 ; small 'same' pad of the 3K-channel packed input --
    x = 2.0 * x_ref[...] - 1.0                                # (TB, L, 3K)
    if pad > 0:
        zz = jnp.zeros((TB, pad, CK), jnp.float32)
        xp = jnp.concatenate([zz, x, zz], axis=1)             # (TB, L+2p, 3K) tiny
    else:
        xp = x

    # --- layer 0: ks accumulated matmuls (no im2col buffer) ------------------
    acc = jnp.zeros((M, Cp), jnp.float32) + b0_ref[...]
    for t in range(ks):
        tap = xp[:, t:t + L, :].reshape(M, CK)
        acc = acc + jnp.dot(tap, w0_ref[t], preferred_element_type=jnp.float32)
    h = _elu(acc)                                             # (M, Cp)

    # --- hidden layers: persistent padded scratch + ks accumulated matmuls ---
    if n_hidden > 0 and pad > 0:
        zpad = jnp.zeros((TB, pad, Cp), jnp.float32)
        hp_ref[:, :pad, :] = zpad                             # zero pad rows once
        hp_ref[:, pad + L:, :] = zpad
    for layer in range(n_hidden):
        hp_ref[:, pad:pad + L, :] = h.reshape(TB, L, Cp)
        acc = jnp.zeros((M, Cp), jnp.float32) + bh_ref[layer]
        for t in range(ks):
            tap = hp_ref[:, t:t + L, :].reshape(M, Cp)
            acc = acc + jnp.dot(tap, wh_ref[layer, t],
                                preferred_element_type=jnp.float32)
        h = _elu(acc)

    # --- three Linear(C,1) heads as one (Cp, 3) matmul, then enc_act (elu) ---
    y = _elu(jnp.dot(h, wl_ref[...], preferred_element_type=jnp.float32)
             + bl_ref[...])                                   # (M, 3)
    y_ref[...] = y.reshape(TB, L, 3)

    # --- per-tile partial moments for the power constraint -------------------
    s = jnp.sum(y, keepdims=True)                             # (1, 1)
    sq = jnp.sum(y * y, keepdims=True)
    zeros_t = jnp.zeros((8, 128), jnp.float32)
    stats_ref[0, 0] = zeros_t + s
    stats_ref[0, 1] = zeros_t + sq


# ---------------------------------------------------------------------------
# Kernel 2: power-constraint finalize, (y - mean) * rsqrt(var)
# ---------------------------------------------------------------------------
def _normalize_kernel(scal_ref, y_ref, out_ref):
    mean = scal_ref[0]
    rstd = scal_ref[1]
    out_ref[...] = (y_ref[...] - mean) * rstd


# ---------------------------------------------------------------------------
# Parameter packing: three branches -> block-diagonal, lane-padded weights
# ---------------------------------------------------------------------------
def _pack_encoder_params(params, c_pad=128):
    branches = (params["branch1"], params["branch2"], params["branch3"])
    ks, K, C = branches[0][0].shape
    n_hidden = branches[0][2].shape[0]
    assert 3 * C <= c_pad
    nh = max(n_hidden, 1)

    w0 = jnp.zeros((ks, 3 * K, c_pad), jnp.float32)
    b0 = jnp.zeros((1, c_pad), jnp.float32)
    wh = jnp.zeros((nh, ks, c_pad, c_pad), jnp.float32)
    bh = jnp.zeros((nh, 1, c_pad), jnp.float32)
    wl = jnp.zeros((c_pad, 3), jnp.float32)
    bl = jnp.zeros((1, 3), jnp.float32)
    for r, (w0_r, b0_r, wh_r, bh_r, wl_r, bl_r) in enumerate(branches):
        w0 = w0.at[:, r * K:(r + 1) * K, r * C:(r + 1) * C].set(w0_r)
        b0 = b0.at[:, r * C:(r + 1) * C].set(b0_r)
        if n_hidden > 0:
            wh = wh.at[:n_hidden, :, r * C:(r + 1) * C, r * C:(r + 1) * C].set(wh_r)
            bh = bh.at[:n_hidden, 0, r * C:(r + 1) * C].set(bh_r)
        wl = wl.at[r * C:(r + 1) * C, r:r + 1].set(wl_r)
        bl = bl.at[:, r:r + 1].set(bl_r)
    return w0, b0, wh, bh, wl, bl, n_hidden


def _choose_tile_b(B, L, target_rows=512):
    tb = max(1, min(B, max(1, target_rows // max(L, 1))))
    while B % tb:                      # need an exact divisor (no masking path)
        tb -= 1
    return tb


# ---------------------------------------------------------------------------
# Wrapper
# ---------------------------------------------------------------------------
def enc_inter_cnn2int_forward(inputs, params, p_array1, p_array2,
                              *, tile_b=None, c_pad=128):
    """Forward pass of ENC_interCNN2Int (eval mode, batch power statistics)."""
    B, L, K = inputs.shape
    w0, b0, wh, bh, wl, bl, n_hidden = _pack_encoder_params(params, c_pad)
    ks = w0.shape[0]
    pad = ks // 2

    if tile_b is None:
        tile_b = _choose_tile_b(B, L)
    assert B % tile_b == 0, "batch must be divisible by the batch tile"
    num_tiles = B // tile_b

    # Interleaver gathers once on the raw input (permutation commutes with the
    # in-kernel 2x-1 affine): replaces the old O(L^2) one-hot matmuls.
    x = inputs.astype(jnp.float32)
    x_packed = jnp.concatenate(
        [x, jnp.take(x, p_array1, axis=1), jnp.take(x, p_array2, axis=1)],
        axis=2)                                               # (B, L, 3K)

    # --- cost / VMEM budgeting ------------------------------------------------
    flops = 2 * B * L * (ks * 3 * K * c_pad + n_hidden * ks * c_pad * c_pad
                         + c_pad * 3)
    transcendentals = B * L * (c_pad * (1 + n_hidden) + 3)
    bytes_accessed = 4 * (x_packed.size + w0.size + b0.size + wh.size + bh.size
                          + wl.size + bl.size + 2 * B * L * 3
                          + num_tiles * 2 * 8 * 128)
    m_rows = tile_b * L
    vmem_est = 4 * (w0.size + b0.size + wh.size + bh.size + wl.size + bl.size
                    + 2 * (tile_b * L * 3 * K + tile_b * L * 3 + 2 * 8 * 128)
                    + tile_b * (L + 2 * pad) * c_pad
                    + 6 * m_rows * c_pad)
    vmem_limit = int(min(max(4 * vmem_est, 8 * 2**20), 40 * 2**20))

    kernel = functools.partial(_encoder_tile_kernel, n_hidden=n_hidden)
    y, stats = pl.pallas_call(
        kernel,
        grid=(num_tiles,),
        in_specs=[
            pl.BlockSpec((tile_b, L, 3 * K), lambda i: (i, 0, 0)),
            # Weights/biases: full-shape blocks, constant index maps -> resident.
            pl.BlockSpec(w0.shape, lambda i: (0, 0, 0)),
            pl.BlockSpec(b0.shape, lambda i: (0, 0)),
            pl.BlockSpec(wh.shape, lambda i: (0, 0, 0, 0)),
            pl.BlockSpec(bh.shape, lambda i: (0, 0, 0)),
            pl.BlockSpec(wl.shape, lambda i: (0, 0)),
            pl.BlockSpec(bl.shape, lambda i: (0, 0)),
        ],
        out_shape=(
            jax.ShapeDtypeStruct((B, L, 3), jnp.float32),
            jax.ShapeDtypeStruct((num_tiles, 2, 8, 128), jnp.float32),
        ),
        out_specs=(
            pl.BlockSpec((tile_b, L, 3), lambda i: (i, 0, 0)),
            pl.BlockSpec((1, 2, 8, 128), lambda i: (i, 0, 0, 0)),
        ),
        scratch_shapes=[pltpu.VMEM((tile_b, L + 2 * pad, c_pad), jnp.float32)],
        compiler_params=pltpu.CompilerParams(
            dimension_semantics=("parallel",),
            vmem_limit_bytes=vmem_limit),
        cost_estimate=pl.CostEstimate(flops=int(flops),
                                      transcendentals=int(transcendentals),
                                      bytes_accessed=int(bytes_accessed)),
    )(x_packed, w0, b0, wh, bh, wl, bl)

    # --- power-constraint finalize: combine per-tile moments -------------------
    # TODO(synk): for very large B*L use a compensated / pairwise combination.
    n = float(B * L * 3)
    total = jnp.sum(stats[:, 0, 0, 0])
    total_sq = jnp.sum(stats[:, 1, 0, 0])
    mean = total / n
    var = (total_sq - n * mean * mean) / (n - 1.0)            # torch unbiased std
    scal = jnp.stack([mean, lax.rsqrt(var)]).astype(jnp.float32)   # (2,)

    codes = pl.pallas_call(
        _normalize_kernel,
        grid=(num_tiles,),
        in_specs=[
            pl.BlockSpec((2,), lambda i: (0,),
                         memory_space=pltpu.MemorySpace.SMEM),
            pl.BlockSpec((tile_b, L, 3), lambda i: (i, 0, 0)),
        ],
        out_shape=jax.ShapeDtypeStruct((B, L, 3), jnp.float32),
        out_specs=pl.BlockSpec((tile_b, L, 3), lambda i: (i, 0, 0)),
        compiler_params=pltpu.CompilerParams(
            dimension_semantics=("parallel",)),
    )(scal, y)
    return codes


# ---------------------------------------------------------------------------
# Pure-JAX reference (for sanity checking)
# ---------------------------------------------------------------------------
def _ref_branch(x, params):
    w0, b0, wh, bh, wl, bl = params
    ks = w0.shape[0]
    pad = ks // 2

    def conv(h, w, b):
        L = h.shape[1]
        hp = jnp.pad(h, ((0, 0), (pad, pad), (0, 0)))
        acc = sum(jnp.einsum("blc,co->blo", hp[:, t:t + L, :], w[t],
                             precision=lax.Precision.HIGHEST)
                  for t in range(ks))
        return jax.nn.elu(acc + b)

    h = conv(x, w0, b0)
    for layer in range(wh.shape[0]):
        h = conv(h, wh[layer], bh[layer:layer + 1])
    y = jnp.einsum("blc,co->blo", h, wl, precision=lax.Precision.HIGHEST) + bl
    return jax.nn.elu(y)


def _ref_forward(inputs, params, p_array1, p_array2):
    x = 2.0 * inputs - 1.0
    x_sys = _ref_branch(x, params["branch1"])
    x_p1 = _ref_branch(jnp.take(x, p_array1, axis=1), params["branch2"])
    x_p2 = _ref_branch(jnp.take(x, p_array2, axis=1), params["branch3"])
    x_tx = jnp.concatenate([x_sys, x_p1, x_p2], axis=2)
    return (x_tx - jnp.mean(x_tx)) / jnp.std(x_tx, ddof=1)


# ---------------------------------------------------------------------------
# Deterministic parameter init
# ---------------------------------------------------------------------------
def init_branch_params(key, cin, cout, ks, num_layer):
    keys = jax.random.split(key, 6)
    n_hidden = num_layer - 1
    w0 = 0.1 * jax.random.normal(keys[0], (ks, cin, cout), jnp.float32)
    b0 = 0.1 * jax.random.normal(keys[1], (1, cout), jnp.float32)
    wh = 0.1 * jax.random.normal(keys[2], (n_hidden, ks, cout, cout), jnp.float32)
    bh = 0.1 * jax.random.normal(keys[3], (n_hidden, cout), jnp.float32)
    wl = 0.1 * jax.random.normal(keys[4], (cout, 1), jnp.float32)
    bl = 0.1 * jax.random.normal(keys[5], (1, 1), jnp.float32)
    return (w0, b0, wh, bh, wl, bl)


if __name__ == "__main__":
    # small args: batch=4, block_len=16, code_rate_k=1, enc_num_unit=32,
    #             enc_num_layer=2, dec_kernel_size=5, enc_act='elu'
    B, L, K = 4, 16, 1
    enc_num_unit = 32
    enc_num_layer = 2
    kernel_size = 5

    key = jax.random.PRNGKey(0)
    k_in, k1, k2, k3 = jax.random.split(key, 4)
    inputs = jax.random.bernoulli(k_in, 0.5, (B, L, K)).astype(jnp.float32)

    params = {
        "branch1": init_branch_params(k1, K, enc_num_unit, kernel_size, enc_num_layer),
        "branch2": init_branch_params(k2, K, enc_num_unit, kernel_size, enc_num_layer),
        "branch3": init_branch_params(k3, K, enc_num_unit, kernel_size, enc_num_layer),
    }

    # Interleaver permutations (module uses numpy mtrand; seed2=1000 as in __init__)
    p_array1 = jnp.asarray(np.random.RandomState(0).permutation(np.arange(L)), jnp.int32)
    p_array2 = jnp.asarray(np.random.RandomState(1000).permutation(np.arange(L)), jnp.int32)

    # tile_b=2 -> grid=(2,), exercising multi-tile pipelining + partial moments.
    fwd = jax.jit(functools.partial(enc_inter_cnn2int_forward, tile_b=2))
    codes = jax.block_until_ready(fwd(inputs, params, p_array1, p_array2))

    assert codes.shape == (B, L, 3)
    assert bool(jnp.all(jnp.isfinite(codes)))

    ref = _ref_forward(inputs, params, p_array1, p_array2)
    np.testing.assert_allclose(np.asarray(codes), np.asarray(ref),
                               rtol=2e-2, atol=2e-2)

    print("KERNEL_OK")
</pallas_src>

<mosaic_0001>
module attributes {stable_mosaic.version = 11 : i64} {
  func.func @_encoder_tile_kernel(%arg0: i32, %arg1: memref<2x16x3xf32, #tpu.memory_space<vmem>>, %arg2: memref<5x3x128xf32, #tpu.memory_space<vmem>>, %arg3: memref<1x128xf32, #tpu.memory_space<vmem>>, %arg4: memref<1x5x128x128xf32, #tpu.memory_space<vmem>>, %arg5: memref<1x1x128xf32, #tpu.memory_space<vmem>>, %arg6: memref<128x3xf32, #tpu.memory_space<vmem>>, %arg7: memref<1x3xf32, #tpu.memory_space<vmem>>, %arg8: memref<2x16x3xf32, #tpu.memory_space<vmem>>, %arg9: memref<1x2x8x128xf32, #tpu.memory_space<vmem>>, %arg10: memref<2x20x128xf32, #tpu.memory_space<vmem>>) attributes {dimension_semantics = [#tpu.dimension_semantics<parallel>], iteration_bounds = array<i64: 2>, scalar_prefetch = 0 : i64, scratch_operands = 1 : i64, tpu.core_type = #tpu.core_type<tc>, window_params = [{transform_indices = @transform_0, window_bounds = array<i64: 2, 16, 3>}, {pipeline_mode = #tpu.pipeline_mode<synchronous>, transform_indices = @transform_1, window_bounds = array<i64: 5, 3, 128>}, {pipeline_mode = #tpu.pipeline_mode<synchronous>, transform_indices = @transform_2, window_bounds = array<i64: 1, 128>}, {pipeline_mode = #tpu.pipeline_mode<synchronous>, transform_indices = @transform_3, window_bounds = array<i64: 1, 5, 128, 128>}, {pipeline_mode = #tpu.pipeline_mode<synchronous>, transform_indices = @transform_4, window_bounds = array<i64: 1, 1, 128>}, {pipeline_mode = #tpu.pipeline_mode<synchronous>, transform_indices = @transform_5, window_bounds = array<i64: 128, 3>}, {pipeline_mode = #tpu.pipeline_mode<synchronous>, transform_indices = @transform_6, window_bounds = array<i64: 1, 3>}, {transform_indices = @transform_7, window_bounds = array<i64: 2, 16, 3>}, {transform_indices = @transform_8, window_bounds = array<i64: 1, 2, 8, 128>}]} {
    %c0 = arith.constant 0 : index
    %c0_0 = arith.constant 0 : index
    %c0_1 = arith.constant 0 : index
    %0 = vector.load %arg1[%c0, %c0_0, %c0_1] : memref<2x16x3xf32, #tpu.memory_space<vmem>>, vector<2x16x3xf32>
    %cst = arith.constant 2.000000e+00 : f32
    %1 = vector.broadcast %cst : f32 to vector<2x16x3xf32>
    %2 = arith.mulf %1, %0 : vector<2x16x3xf32>
    %cst_2 = arith.constant 1.000000e+00 : f32
    %3 = vector.broadcast %cst_2 : f32 to vector<2x16x3xf32>
    %4 = arith.subf %2, %3 : vector<2x16x3xf32>
    %cst_3 = arith.constant 0.000000e+00 : f32
    %5 = vector.broadcast %cst_3 : f32 to vector<2x2x3xf32>
    %6 = tpu.concatenate %5, %4, %5 in 1 : vector<2x2x3xf32>, vector<2x16x3xf32>, vector<2x2x3xf32> -> vector<2x20x3xf32>
    %cst_4 = arith.constant 0.000000e+00 : f32
    %7 = vector.broadcast %cst_4 : f32 to vector<32x128xf32>
    %c0_5 = arith.constant 0 : index
    %c0_6 = arith.constant 0 : index
    %8 = vector.load %arg3[%c0_5, %c0_6] : memref<1x128xf32, #tpu.memory_space<vmem>>, vector<1x128xf32>
    %9 = vector.broadcast %8 : vector<1x128xf32> to vector<32x128xf32>
    %10 = arith.addf %7, %9 : vector<32x128xf32>
    %11 = vector.extract_strided_slice %6 {offsets = [0, 0, 0], sizes = [2, 16, 3], strides = [1, 1, 1]} : vector<2x20x3xf32> to vector<2x16x3xf32>
    %12 = vector.shape_cast %11 : vector<2x16x3xf32> to vector<32x3xf32>
    %c0_7 = arith.constant 0 : index
    %c0_8 = arith.constant 0 : index
    %c0_9 = arith.constant 0 : index
    %13 = vector.load %arg2[%c0_7, %c0_8, %c0_9] : memref<5x3x128xf32, #tpu.memory_space<vmem>>, vector<1x3x128xf32>
    %14 = vector.shape_cast %13 : vector<1x3x128xf32> to vector<3x128xf32>
    %cst_10 = arith.constant dense<0.000000e+00> : vector<32x128xf32>
    %15 = tpu.matmul %12, %14, %cst_10 {dimension_numbers = #tpu.dot_dimension_numbers<[1], [0], [0], [1], [0, 0, 1, 1], [], []>} : vector<32x3xf32>, vector<3x128xf32>, vector<32x128xf32> -> vector<32x128xf32>
    %16 = arith.addf %10, %15 : vector<32x128xf32>
    %17 = vector.extract_strided_slice %6 {offsets = [0, 1, 0], sizes = [2, 16, 3], strides = [1, 1, 1]} : vector<2x20x3xf32> to vector<2x16x3xf32>
    %18 = vector.shape_cast %17 : vector<2x16x3xf32> to vector<32x3xf32>
    %c1 = arith.constant 1 : index
    %c0_11 = arith.constant 0 : index
    %c0_12 = arith.constant 0 : index
    %19 = vector.load %arg2[%c1, %c0_11, %c0_12] : memref<5x3x128xf32, #tpu.memory_space<vmem>>, vector<1x3x128xf32>
    %20 = vector.shape_cast %19 : vector<1x3x128xf32> to vector<3x128xf32>
    %cst_13 = arith.constant dense<0.000000e+00> : vector<32x128xf32>
    %21 = tpu.matmul %18, %20, %cst_13 {dimension_numbers = #tpu.dot_dimension_numbers<[1], [0], [0], [1], [0, 0, 1, 1], [], []>} : vector<32x3xf32>, vector<3x128xf32>, vector<32x128xf32> -> vector<32x128xf32>
    %22 = arith.addf %16, %21 : vector<32x128xf32>
    %23 = vector.extract_strided_slice %6 {offsets = [0, 2, 0], sizes = [2, 16, 3], strides = [1, 1, 1]} : vector<2x20x3xf32> to vector<2x16x3xf32>
    %24 = vector.shape_cast %23 : vector<2x16x3xf32> to vector<32x3xf32>
    %c2 = arith.constant 2 : index
    %c0_14 = arith.constant 0 : index
    %c0_15 = arith.constant 0 : index
    %25 = vector.load %arg2[%c2, %c0_14, %c0_15] : memref<5x3x128xf32, #tpu.memory_space<vmem>>, vector<1x3x128xf32>
    %26 = vector.shape_cast %25 : vector<1x3x128xf32> to vector<3x128xf32>
    %cst_16 = arith.constant dense<0.000000e+00> : vector<32x128xf32>
    %27 = tpu.matmul %24, %26, %cst_16 {dimension_numbers = #tpu.dot_dimension_numbers<[1], [0], [0], [1], [0, 0, 1, 1], [], []>} : vector<32x3xf32>, vector<3x128xf32>, vector<32x128xf32> -> vector<32x128xf32>
    %28 = arith.addf %22, %27 : vector<32x128xf32>
    %29 = vector.extract_strided_slice %6 {offsets = [0, 3, 0], sizes = [2, 16, 3], strides = [1, 1, 1]} : vector<2x20x3xf32> to vector<2x16x3xf32>
    %30 = vector.shape_cast %29 : vector<2x16x3xf32> to vector<32x3xf32>
    %c3 = arith.constant 3 : index
    %c0_17 = arith.constant 0 : index
    %c0_18 = arith.constant 0 : index
    %31 = vector.load %arg2[%c3, %c0_17, %c0_18] : memref<5x3x128xf32, #tpu.memory_space<vmem>>, vector<1x3x128xf32>
    %32 = vector.shape_cast %31 : vector<1x3x128xf32> to vector<3x128xf32>
    %cst_19 = arith.constant dense<0.000000e+00> : vector<32x128xf32>
    %33 = tpu.matmul %30, %32, %cst_19 {dimension_numbers = #tpu.dot_dimension_numbers<[1], [0], [0], [1], [0, 0, 1, 1], [], []>} : vector<32x3xf32>, vector<3x128xf32>, vector<32x128xf32> -> vector<32x128xf32>
    %34 = arith.addf %28, %33 : vector<32x128xf32>
    %35 = vector.extract_strided_slice %6 {offsets = [0, 4, 0], sizes = [2, 16, 3], strides = [1, 1, 1]} : vector<2x20x3xf32> to vector<2x16x3xf32>
    %36 = vector.shape_cast %35 : vector<2x16x3xf32> to vector<32x3xf32>
    %c4 = arith.constant 4 : index
    %c0_20 = arith.constant 0 : index
    %c0_21 = arith.constant 0 : index
    %37 = vector.load %arg2[%c4, %c0_20, %c0_21] : memref<5x3x128xf32, #tpu.memory_space<vmem>>, vector<1x3x128xf32>
    %38 = vector.shape_cast %37 : vector<1x3x128xf32> to vector<3x128xf32>
    %cst_22 = arith.constant dense<0.000000e+00> : vector<32x128xf32>
    %39 = tpu.matmul %36, %38, %cst_22 {dimension_numbers = #tpu.dot_dimension_numbers<[1], [0], [0], [1], [0, 0, 1, 1], [], []>} : vector<32x3xf32>, vector<3x128xf32>, vector<32x128xf32> -> vector<32x128xf32>
    %40 = arith.addf %34, %39 : vector<32x128xf32>
    %cst_23 = arith.constant 0.000000e+00 : f32
    %41 = vector.broadcast %cst_23 : f32 to vector<32x128xf32>
    %42 = arith.cmpf ogt, %40, %41 : vector<32x128xf32>
    %43 = math.exp %40 : vector<32x128xf32>
    %cst_24 = arith.constant 1.000000e+00 : f32
    %44 = vector.broadcast %cst_24 : f32 to vector<32x128xf32>
    %45 = arith.subf %43, %44 : vector<32x128xf32>
    %46 = arith.select %42, %40, %45 : vector<32x128xi1>, vector<32x128xf32>
    %cst_25 = arith.constant 0.000000e+00 : f32
    %47 = vector.broadcast %cst_25 : f32 to vector<2x2x128xf32>
    %c0_26 = arith.constant 0 : index
    %c0_27 = arith.constant 0 : index
    %c0_28 = arith.constant 0 : index
    %48 = vector.load %arg10[%c0_26, %c0_27, %c0_28] : memref<2x20x128xf32, #tpu.memory_space<vmem>>, vector<2x2x128xf32>
    tpu.vector_store %arg10[%c0_26, %c0_27, %c0_28], %47 {strides = array<i32>} : memref<2x20x128xf32, #tpu.memory_space<vmem>>, vector<2x2x128xf32>,
    %c0_29 = arith.constant 0 : index
    %c18 = arith.constant 18 : index
    %c0_30 = arith.constant 0 : index
    %49 = vector.load %arg10[%c0_29, %c18, %c0_30] : memref<2x20x128xf32, #tpu.memory_space<vmem>>, vector<2x2x128xf32>
    tpu.vector_store %arg10[%c0_29, %c18, %c0_30], %47 {strides = array<i32>} : memref<2x20x128xf32, #tpu.memory_space<vmem>>, vector<2x2x128xf32>,
    %50 = vector.shape_cast %46 : vector<32x128xf32> to vector<2x16x128xf32>
    %c0_31 = arith.constant 0 : index
    %c2_32 = arith.constant 2 : index
    %c0_33 = arith.constant 0 : index
    %51 = vector.load %arg10[%c0_31, %c2_32, %c0_33] : memref<2x20x128xf32, #tpu.memory_space<vmem>>, vector<2x16x128xf32>
    tpu.vector_store %arg10[%c0_31, %c2_32, %c0_33], %50 {strides = array<i32>} : memref<2x20x128xf32, #tpu.memory_space<vmem>>, vector<2x16x128xf32>,
    %cst_34 = arith.constant 0.000000e+00 : f32
    %52 = vector.broadcast %cst_34 : f32 to vector<32x128xf32>
    %c0_35 = arith.constant 0 : index
    %c0_36 = arith.constant 0 : index
    %c0_37 = arith.constant 0 : index
    %53 = vector.load %arg5[%c0_35, %c0_36, %c0_37] : memref<1x1x128xf32, #tpu.memory_space<vmem>>, vector<1x1x128xf32>
    %54 = vector.shape_cast %53 : vector<1x1x128xf32> to vector<1x128xf32>
    %55 = vector.broadcast %54 : vector<1x128xf32> to vector<32x128xf32>
    %56 = arith.addf %52, %55 : vector<32x128xf32>
    %c0_38 = arith.constant 0 : index
    %c0_39 = arith.constant 0 : index
    %c0_40 = arith.constant 0 : index
    %57 = vector.load %arg10[%c0_38, %c0_39, %c0_40] : memref<2x20x128xf32, #tpu.memory_space<vmem>>, vector<2x16x128xf32>
    %58 = vector.shape_cast %57 : vector<2x16x128xf32> to vector<32x128xf32>
    %c0_41 = arith.constant 0 : index
    %c0_42 = arith.constant 0 : index
    %c0_43 = arith.constant 0 : index
    %c0_44 = arith.constant 0 : index
    %59 = vector.load %arg4[%c0_41, %c0_42, %c0_43, %c0_44] : memref<1x5x128x128xf32, #tpu.memory_space<vmem>>, vector<1x1x128x128xf32>
    %60 = vector.shape_cast %59 : vector<1x1x128x128xf32> to vector<128x128xf32>
    %cst_45 = arith.constant dense<0.000000e+00> : vector<32x128xf32>
    %61 = tpu.matmul %58, %60, %cst_45 {dimension_numbers = #tpu.dot_dimension_numbers<[1], [0], [0], [1], [0, 0, 1, 1], [], []>} : vector<32x128xf32>, vector<128x128xf32>, vector<32x128xf32> -> vector<32x128xf32>
    %62 = arith.addf %56, %61 : vector<32x128xf32>
    %c0_46 = arith.constant 0 : index
    %c1_47 = arith.constant 1 : index
    %c0_48 = arith.constant 0 : index
    %63 = vector.load %arg10[%c0_46, %c1_47, %c0_48] : memref<2x20x128xf32, #tpu.memory_space<vmem>>, vector<2x16x128xf32>
    %64 = vector.shape_cast %63 : vector<2x16x128xf32> to vector<32x128xf32>
    %c0_49 = arith.constant 0 : index
    %c1_50 = arith.constant 1 : index
    %c0_51 = arith.constant 0 : index
    %c0_52 = arith.constant 0 : index
    %65 = vector.load %arg4[%c0_49, %c1_50, %c0_51, %c0_52] : memref<1x5x128x128xf32, #tpu.memory_space<vmem>>, vector<1x1x128x128xf32>
    %66 = vector.shape_cast %65 : vector<1x1x128x128xf32> to vector<128x128xf32>
    %cst_53 = arith.constant dense<0.000000e+00> : vector<32x128xf32>
    %67 = tpu.matmul %64, %66, %cst_53 {dimension_numbers = #tpu.dot_dimension_numbers<[1], [0], [0], [1], [0, 0, 1, 1], [], []>} : vector<32x128xf32>, vector<128x128xf32>, vector<32x128xf32> -> vector<32x128xf32>
    %68 = arith.addf %62, %67 : vector<32x128xf32>
    %c0_54 = arith.constant 0 : index
    %c2_55 = arith.constant 2 : index
    %c0_56 = arith.constant 0 : index
    %69 = vector.load %arg10[%c0_54, %c2_55, %c0_56] : memref<2x20x128xf32, #tpu.memory_space<vmem>>, vector<2x16x128xf32>
    %70 = vector.shape_cast %69 : vector<2x16x128xf32> to vector<32x128xf32>
    %c0_57 = arith.constant 0 : index
    %c2_58 = arith.constant 2 : index
    %c0_59 = arith.constant 0 : index
    %c0_60 = arith.constant 0 : index
    %71 = vector.load %arg4[%c0_57, %c2_58, %c0_59, %c0_60] : memref<1x5x128x128xf32, #tpu.memory_space<vmem>>, vector<1x1x128x128xf32>
    %72 = vector.shape_cast %71 : vector<1x1x128x128xf32> to vector<128x128xf32>
    %cst_61 = arith.constant dense<0.000000e+00> : vector<32x128xf32>
    %73 = tpu.matmul %70, %72, %cst_61 {dimension_numbers = #tpu.dot_dimension_numbers<[1], [0], [0], [1], [0, 0, 1, 1], [], []>} : vector<32x128xf32>, vector<128x128xf32>, vector<32x128xf32> -> vector<32x128xf32>
    %74 = arith.addf %68, %73 : vector<32x128xf32>
    %c0_62 = arith.constant 0 : index
    %c3_63 = arith.constant 3 : index
    %c0_64 = arith.constant 0 : index
    %75 = vector.load %arg10[%c0_62, %c3_63, %c0_64] : memref<2x20x128xf32, #tpu.memory_space<vmem>>, vector<2x16x128xf32>
    %76 = vector.shape_cast %75 : vector<2x16x128xf32> to vector<32x128xf32>
    %c0_65 = arith.constant 0 : index
    %c3_66 = arith.constant 3 : index
    %c0_67 = arith.constant 0 : index
    %c0_68 = arith.constant 0 : index
    %77 = vector.load %arg4[%c0_65, %c3_66, %c0_67, %c0_68] : memref<1x5x128x128xf32, #tpu.memory_space<vmem>>, vector<1x1x128x128xf32>
    %78 = vector.shape_cast %77 : vector<1x1x128x128xf32> to vector<128x128xf32>
    %cst_69 = arith.constant dense<0.000000e+00> : vector<32x128xf32>
    %79 = tpu.matmul %76, %78, %cst_69 {dimension_numbers = #tpu.dot_dimension_numbers<[1], [0], [0], [1], [0, 0, 1, 1], [], []>} : vector<32x128xf32>, vector<128x128xf32>, vector<32x128xf32> -> vector<32x128xf32>
    %80 = arith.addf %74, %79 : vector<32x128xf32>
    %c0_70 = arith.constant 0 : index
    %c4_71 = arith.constant 4 : index
    %c0_72 = arith.constant 0 : index
    %81 = vector.load %arg10[%c0_70, %c4_71, %c0_72] : memref<2x20x128xf32, #tpu.memory_space<vmem>>, vector<2x16x128xf32>
    %82 = vector.shape_cast %81 : vector<2x16x128xf32> to vector<32x128xf32>
    %c0_73 = arith.constant 0 : index
    %c4_74 = arith.constant 4 : index
    %c0_75 = arith.constant 0 : index
    %c0_76 = arith.constant 0 : index
    %83 = vector.load %arg4[%c0_73, %c4_74, %c0_75, %c0_76] : memref<1x5x128x128xf32, #tpu.memory_space<vmem>>, vector<1x1x128x128xf32>
    %84 = vector.shape_cast %83 : vector<1x1x128x128xf32> to vector<128x128xf32>
    %cst_77 = arith.constant dense<0.000000e+00> : vector<32x128xf32>
    %85 = tpu.matmul %82, %84, %cst_77 {dimension_numbers = #tpu.dot_dimension_numbers<[1], [0], [0], [1], [0, 0, 1, 1], [], []>} : vector<32x128xf32>, vector<128x128xf32>, vector<32x128xf32> -> vector<32x128xf32>
    %86 = arith.addf %80, %85 : vector<32x128xf32>
    %cst_78 = arith.constant 0.000000e+00 : f32
    %87 = vector.broadcast %cst_78 : f32 to vector<32x128xf32>
    %88 = arith.cmpf ogt, %86, %87 : vector<32x128xf32>
    %89 = math.exp %86 : vector<32x128xf32>
    %cst_79 = arith.constant 1.000000e+00 : f32
    %90 = vector.broadcast %cst_79 : f32 to vector<32x128xf32>
    %91 = arith.subf %89, %90 : vector<32x128xf32>
    %92 = arith.select %88, %86, %91 : vector<32x128xi1>, vector<32x128xf32>
    %c0_80 = arith.constant 0 : index
    %c0_81 = arith.constant 0 : index
    %93 = vector.load %arg6[%c0_80, %c0_81] : memref<128x3xf32, #tpu.memory_space<vmem>>, vector<128x3xf32>
    %cst_82 = arith.constant dense<0.000000e+00> : vector<32x3xf32>
    %94 = tpu.matmul %92, %93, %cst_82 {dimension_numbers = #tpu.dot_dimension_numbers<[1], [0], [0], [1], [0, 0, 1, 1], [], []>} : vector<32x128xf32>, vector<128x3xf32>, vector<32x3xf32> -> vector<32x3xf32>
    %c0_83 = arith.constant 0 : index
    %c0_84 = arith.constant 0 : index
    %95 = vector.load %arg7[%c0_83, %c0_84] : memref<1x3xf32, #tpu.memory_space<vmem>>, vector<1x3xf32>
    %96 = vector.broadcast %95 : vector<1x3xf32> to vector<32x3xf32>
    %97 = arith.addf %94, %96 : vector<32x3xf32>
    %cst_85 = arith.constant 0.000000e+00 : f32
    %98 = vector.broadcast %cst_85 : f32 to vector<32x3xf32>
    %99 = arith.cmpf ogt, %97, %98 : vector<32x3xf32>
    %100 = math.exp %97 : vector<32x3xf32>
    %cst_86 = arith.constant 1.000000e+00 : f32
    %101 = vector.broadcast %cst_86 : f32 to vector<32x3xf32>
    %102 = arith.subf %100, %101 : vector<32x3xf32>
    %103 = arith.select %99, %97, %102 : vector<32x3xi1>, vector<32x3xf32>
    %104 = vector.shape_cast %103 : vector<32x3xf32> to vector<2x16x3xf32>
    %c0_87 = arith.constant 0 : index
    %c0_88 = arith.constant 0 : index
    %c0_89 = arith.constant 0 : index
    %105 = vector.load %arg8[%c0_87, %c0_88, %c0_89] : memref<2x16x3xf32, #tpu.memory_space<vmem>>, vector<2x16x3xf32>
    tpu.vector_store %arg8[%c0_87, %c0_88, %c0_89], %104 {strides = array<i32>} : memref<2x16x3xf32, #tpu.memory_space<vmem>>, vector<2x16x3xf32>,
    %106 = vector.shape_cast %103 : vector<32x3xf32> to vector<1x32x3xf32>
    %cst_90 = arith.constant dense<0.000000e+00> : vector<1xf32>
    %107 = vector.multi_reduction <add>, %106, %cst_90 [1, 2] : vector<1x32x3xf32> to vector<1xf32>
    %108 = vector.shape_cast %107 : vector<1xf32> to vector<1x1x1xf32>
    %109 = vector.extract %108[0, 0, 0] : f32 from vector<1x1x1xf32>
    %110 = vector.broadcast %109 : f32 to vector<1x1xf32>
    %111 = arith.mulf %103, %103 : vector<32x3xf32>
    %112 = vector.shape_cast %111 : vector<32x3xf32> to vector<1x32x3xf32>
    %cst_91 = arith.constant dense<0.000000e+00> : vector<1xf32>
    %113 = vector.multi_reduction <add>, %112, %cst_91 [1, 2] : vector<1x32x3xf32> to vector<1xf32>
    %114 = vector.shape_cast %113 : vector<1xf32> to vector<1x1x1xf32>
    %115 = vector.extract %114[0, 0, 0] : f32 from vector<1x1x1xf32>
    %116 = vector.broadcast %115 : f32 to vector<1x1xf32>
    %cst_92 = arith.constant 0.000000e+00 : f32
    %117 = vector.broadcast %cst_92 : f32 to vector<8x128xf32>
    %118 = vector.broadcast %110 : vector<1x1xf32> to vector<8x128xf32>
    %119 = arith.addf %117, %118 : vector<8x128xf32>
    %c0_93 = arith.constant 0 : index
    %c0_94 = arith.constant 0 : index
    %c0_95 = arith.constant 0 : index
    %c0_96 = arith.constant 0 : index
    %120 = vector.load %arg9[%c0_93, %c0_94, %c0_95, %c0_96] : memref<1x2x8x128xf32, #tpu.memory_space<vmem>>, vector<1x1x8x128xf32>
    %121 = vector.shape_cast %120 : vector<1x1x8x128xf32> to vector<8x128xf32>
    %122 = vector.shape_cast %119 : vector<8x128xf32> to vector<1x1x8x128xf32>
    tpu.vector_store %arg9[%c0_93, %c0_94, %c0_95, %c0_96], %122 {strides = array<i32>} : memref<1x2x8x128xf32, #tpu.memory_space<vmem>>, vector<1x1x8x128xf32>,
    %123 = vector.broadcast %116 : vector<1x1xf32> to vector<8x128xf32>
    %124 = arith.addf %117, %123 : vector<8x128xf32>
    %c0_97 = arith.constant 0 : index
    %c1_98 = arith.constant 1 : index
    %c0_99 = arith.constant 0 : index
    %c0_100 = arith.constant 0 : index
    %125 = vector.load %arg9[%c0_97, %c1_98, %c0_99, %c0_100] : memref<1x2x8x128xf32, #tpu.memory_space<vmem>>, vector<1x1x8x128xf32>
    %126 = vector.shape_cast %125 : vector<1x1x8x128xf32> to vector<8x128xf32>
    %127 = vector.shape_cast %124 : vector<8x128xf32> to vector<1x1x8x128xf32>
    tpu.vector_store %arg9[%c0_97, %c1_98, %c0_99, %c0_100], %127 {strides = array<i32>} : memref<1x2x8x128xf32, #tpu.memory_space<vmem>>, vector<1x1x8x128xf32>,
    return
  }
  func.func @transform_0(%arg0: i32) -> (i32, i32, i32) {
    %c0_i32 = arith.constant 0 : i32
    %c0_i32_0 = arith.constant 0 : i32
    %c0_i32_1 = arith.constant 0 : i32
    return %arg0, %c0_i32, %c0_i32_0 : i32, i32, i32
  }
  func.func @transform_1(%arg0: i32) -> (i32, i32, i32) {
    %c0_i32 = arith.constant 0 : i32
    %c0_i32_0 = arith.constant 0 : i32
    %c0_i32_1 = arith.constant 0 : i32
    %c0_i32_2 = arith.constant 0 : i32
    return %c0_i32, %c0_i32_0, %c0_i32_1 : i32, i32, i32
  }
  func.func @transform_2(%arg0: i32) -> (i32, i32) {
    %c0_i32 = arith.constant 0 : i32
    %c0_i32_0 = arith.constant 0 : i32
    %c0_i32_1 = arith.constant 0 : i32
    return %c0_i32, %c0_i32_0 : i32, i32
  }
  func.func @transform_3(%arg0: i32) -> (i32, i32, i32, i32) {
    %c0_i32 = arith.constant 0 : i32
    %c0_i32_0 = arith.constant 0 : i32
    %c0_i32_1 = arith.constant 0 : i32
    %c0_i32_2 = arith.constant 0 : i32
    %c0_i32_3 = arith.constant 0 : i32
    return %c0_i32, %c0_i32_0, %c0_i32_1, %c0_i32_2 : i32, i32, i32, i32
  }
  func.func @transform_4(%arg0: i32) -> (i32, i32, i32) {
    %c0_i32 = arith.constant 0 : i32
    %c0_i32_0 = arith.constant 0 : i32
    %c0_i32_1 = arith.constant 0 : i32
    %c0_i32_2 = arith.constant 0 : i32
    return %c0_i32, %c0_i32_0, %c0_i32_1 : i32, i32, i32
  }
  func.func @transform_5(%arg0: i32) -> (i32, i32) {
    %c0_i32 = arith.constant 0 : i32
    %c0_i32_0 = arith.constant 0 : i32
    %c0_i32_1 = arith.constant 0 : i32
    return %c0_i32, %c0_i32_0 : i32, i32
  }
  func.func @transform_6(%arg0: i32) -> (i32, i32) {
    %c0_i32 = arith.constant 0 : i32
    %c0_i32_0 = arith.constant 0 : i32
    %c0_i32_1 = arith.constant 0 : i32
    return %c0_i32, %c0_i32_0 : i32, i32
  }
  func.func @transform_7(%arg0: i32) -> (i32, i32, i32) {
    %c0_i32 = arith.constant 0 : i32
    %c0_i32_0 = arith.constant 0 : i32
    %c0_i32_1 = arith.constant 0 : i32
    return %arg0, %c0_i32, %c0_i32_0 : i32, i32, i32
  }
  func.func @transform_8(%arg0: i32) -> (i32, i32, i32, i32) {
    %c0_i32 = arith.constant 0 : i32
    %c0_i32_0 = arith.constant 0 : i32
    %c0_i32_1 = arith.constant 0 : i32
    %c0_i32_2 = arith.constant 0 : i32
    return %arg0, %c0_i32, %c0_i32_0, %c0_i32_1 : i32, i32, i32, i32
  }
}

module attributes {stable_mosaic.version = 11 : i64} {
  func.func @_normalize_kernel(%arg0: i32, %arg1: memref<2xf32, #tpu.memory_space<smem>>, %arg2: memref<2x16x3xf32, #tpu.memory_space<vmem>>, %arg3: memref<2x16x3xf32, #tpu.memory_space<vmem>>) attributes {dimension_semantics = [#tpu.dimension_semantics<parallel>], iteration_bounds = array<i64: 2>, scalar_prefetch = 0 : i64, scratch_operands = 0 : i64, tpu.core_type = #tpu.core_type<tc>, window_params = [{transform_indices = @transform_0, window_bounds = array<i64: 2>}, {transform_indices = @transform_1, window_bounds = array<i64: 2, 16, 3>}, {transform_indices = @transform_2, window_bounds = array<i64: 2, 16, 3>}]} {
    %c0 = arith.constant 0 : index
    %0 = memref.load %arg1[%c0] : memref<2xf32, #tpu.memory_space<smem>>
    %c1 = arith.constant 1 : index
    %1 = memref.load %arg1[%c1] : memref<2xf32, #tpu.memory_space<smem>>
    %c0_0 = arith.constant 0 : index
    %c0_1 = arith.constant 0 : index
    %c0_2 = arith.constant 0 : index
    %2 = vector.load %arg2[%c0_0, %c0_1, %c0_2] : memref<2x16x3xf32, #tpu.memory_space<vmem>>, vector<2x16x3xf32>
    %3 = vector.broadcast %0 : f32 to vector<2x16x3xf32>
    %4 = arith.subf %2, %3 : vector<2x16x3xf32>
    %5 = vector.broadcast %1 : f32 to vector<2x16x3xf32>
    %6 = arith.mulf %4, %5 : vector<2x16x3xf32>
    %c0_3 = arith.constant 0 : index
    %c0_4 = arith.constant 0 : index
    %c0_5 = arith.constant 0 : index
    %7 = vector.load %arg3[%c0_3, %c0_4, %c0_5] : memref<2x16x3xf32, #tpu.memory_space<vmem>>, vector<2x16x3xf32>
    tpu.vector_store %arg3[%c0_3, %c0_4, %c0_5], %6 {strides = array<i32>} : memref<2x16x3xf32, #tpu.memory_space<vmem>>, vector<2x16x3xf32>,
    return
  }
  func.func @transform_0(%arg0: i32) -> i32 {
    %c0_i32 = arith.constant 0 : i32
    %c0_i32_0 = arith.constant 0 : i32
    return %c0_i32 : i32
  }
  func.func @transform_1(%arg0: i32) -> (i32, i32, i32) {
    %c0_i32 = arith.constant 0 : i32
    %c0_i32_0 = arith.constant 0 : i32
    %c0_i32_1 = arith.constant 0 : i32
    return %arg0, %c0_i32, %c0_i32_0 : i32, i32, i32
  }
  func.func @transform_2(%arg0: i32) -> (i32, i32, i32) {
    %c0_i32 = arith.constant 0 : i32
    %c0_i32_0 = arith.constant 0 : i32
    %c0_i32_1 = arith.constant 0 : i32
    return %arg0, %c0_i32, %c0_i32_0 : i32, i32, i32
  }
}

</mosaic_0001>

<llo_original>
// kernel: enc_inter_cnn2int_forward.3
$region0: #{enc_inter_cnn2int_forward.3}
  #allocation0 [shape = 'u32[]', space=smem, size = 0x4, offset = 0x4, fixed_abs, tag = 'smem constant byte address 0x4 - core index']
  #allocation1 [shape = 'u32[144,128]{1,0:T(1,128)}', space=vmem, size = 0x12000, scoped, tag = 'internal scratch']
  %s0 = inlined_call_operand.vmem [shape: f32[2], index: 0, kind: input, shape index: {}]
  %s1 = inlined_call_operand.vmem [shape: f32[4,16,3], index: 1, kind: input, shape index: {}]
  %s2 = inlined_call_operand.vmem [shape: f32[4,16,3], index: 2, kind: output, shape index: {}]
  %s3 = sld [smem:[#allocation0]]
  $region45: #{enc_inter_cnn2int_forward.3} parent=0
    _
  %s5 = ssub.s32 1, %s3
  %s6 = scalar_select 0, %s5, %s3
  $region1: #{enc_inter_cnn2int_forward.3} parent=0
    #allocation2 [shape = 'u8[512]{0}', space=smem, size = 0x200, scoped, tag = 'input window, operand 0, single buffered']
    #allocation3 [shape = 's32[2]{0}', space=sflag, size = 0x8, scoped, tag = 'scoped memory for enc_inter_cnn2int_forward.3']
    %7 = vsyncpa [#allocation3], 0
    loop: start=0, step=1, limit=4
    $region2: #{enc_inter_cnn2int_forward.3} parent=1 // loop_pre_header
      _
    $region3: #{enc_inter_cnn2int_forward.3} parent=1 // loop_header
      %s9 = sphi 0, %s13
      %p10 = scmp.ge.s32.totalorder %s9, 4
      %s17 = sphi 0, %s17
      %s19 = sphi 0, %s17
      %s20 = sphi 0, %s19
      %s34 = sphi 0, %s20
      %s40 = sphi 0, %s42
      %s43 = sphi 0, %s40
      %s44 = sphi 0, %s43
      %s60 = sphi 0, %s44
      %s66 = sphi 0, %s68
      %s69 = sphi 0, %s66
      %s70 = sphi 0, %s69
      %s86 = sphi 0, %s70
    $region4: #{enc_inter_cnn2int_forward.3} parent=1 // loop_header_branch
      %12 = sbr.rel (%p10) target = $region8
    $region5: #{enc_inter_cnn2int_forward.3} parent=1 // loop_body
      %s14 = ssub.s32 %s9, 1
      %s15 = ssub.s32 %s9, 2
      %s16 = sadd.s32 %s9, 1
      %s18 = sadd.s32 %s17, 1
      %p21 = scmp.eq.s32.totalorder %s9, 1
      %p22 = scmp.ne.s32.totalorder %s17, %s19
      %p23 = scmp.eq.s32.totalorder %s9, 0
      %p24 = por %p22, %p23
      %p25 = scmp.ne.s32.totalorder %s17, %s19
      %p26 = scmp.eq.s32.totalorder %s14, 1
      %p27 = por %p25, %p26
      %p28 = scmp.ne.s32.totalorder %s19, %s20
      %p29 = scmp.eq.s32.totalorder %s14, 0
      %p30 = por %p28, %p29
      %p31 = scmp.ne.s32.totalorder %s19, %s20
      %p32 = scmp.eq.s32.totalorder %s15, 1
      %p33 = por %p31, %p32
      %p35 = scmp.ne.s32.totalorder %s20, %s34
      %p36 = scmp.eq.s32.totalorder %s15, 0
      %p37 = por %p35, %p36
      %s38 = ssub.s32 %s9, %s16
      %p39 = scmp.eq.s32.totalorder %s38, 0
      %s41 = sadd.s32 %s40, 1
      %s42 = scalar_select %p39, %s40, %s41
      %p45 = pneg %p39
      %p46 = scmp.eq.s32.totalorder %s9, 1
      %p47 = por %p45, %p46
      %p48 = scmp.ne.s32.totalorder %s40, %s43
      %p49 = scmp.eq.s32.totalorder %s9, 0
      %p50 = por %p48, %p49
      %p51 = scmp.ne.s32.totalorder %s40, %s43
      %p52 = scmp.eq.s32.totalorder %s14, 1
      %p53 = por %p51, %p52
      %p54 = scmp.ne.s32.totalorder %s43, %s44
      %p55 = scmp.eq.s32.totalorder %s14, 0
      %p56 = por %p54, %p55
      %p57 = scmp.ne.s32.totalorder %s43, %s44
      %p58 = scmp.eq.s32.totalorder %s15, 1
      %p59 = por %p57, %p58
      %p61 = scmp.ne.s32.totalorder %s44, %s60
      %p62 = scmp.eq.s32.totalorder %s15, 0
      %p63 = por %p61, %p62
      %s64 = ssub.s32 %s9, %s16
      %p65 = scmp.eq.s32.totalorder %s64, 0
      %s67 = sadd.s32 %s66, 1
      %s68 = scalar_select %p65, %s66, %s67
      %p71 = pneg %p65
      %p72 = scmp.eq.s32.totalorder %s9, 1
      %p73 = por %p71, %p72
      %p74 = scmp.ne.s32.totalorder %s66, %s69
      %p75 = scmp.eq.s32.totalorder %s9, 0
      %p76 = por %p74, %p75
      %p77 = scmp.ne.s32.totalorder %s66, %s69
      %p78 = scmp.eq.s32.totalorder %s14, 1
      %p79 = por %p77, %p78
      %p80 = scmp.ne.s32.totalorder %s69, %s70
      %p81 = scmp.eq.s32.totalorder %s14, 0
      %p82 = por %p80, %p81
      %p83 = scmp.ne.s32.totalorder %s69, %s70
      %p84 = scmp.eq.s32.totalorder %s15, 1
      %p85 = por %p83, %p84
      %p87 = scmp.ne.s32.totalorder %s70, %s86
      %p88 = scmp.eq.s32.totalorder %s15, 0
      %p89 = por %p87, %p88
      %p90 = scmp.le.s32.totalorder 1, %s9
      %p91 = scmp.lt.s32.totalorder %s9, 3
      %p92 = pnand %p90, %p91
      %p93 = pneg %p92
      // Predicated region
      $region9: #{enc_inter_cnn2int_forward.3} parent=5 // pred_check
        _
      $region10: #{enc_inter_cnn2int_forward.3} parent=5 // pred_check_branch
        %95 = sbr.rel (%p92) target = $region12
      $region11: #{enc_inter_cnn2int_forward.3} parent=5 // pred_region
        %s96 = ssub.s32 %s9, 1
        // Predicated region
        $region13: #{enc_inter_cnn2int_forward.3} parent=11 // pred_check
          %p97 = pneg %p30
        $region14: #{enc_inter_cnn2int_forward.3} parent=11 // pred_check_branch
          %99 = sbr.rel (%p97) target = $region16
        $region15: #{enc_inter_cnn2int_forward.3} parent=11 // pred_region
          %s101 = ssub.s32 16, 16
          %102 = vsyncadd [#allocation3], %s101
          %s104 = sshll.u32 %s0, 4
          %s105 = int_to_ptr.vmem [resolvable:$true] %s104
          %107 = dma.vmem_to_smem %s105, 16, [#allocation2], [#allocation3]
        $region16: #{enc_inter_cnn2int_forward.3} parent=11 // pred_fallthru
          _
      $region12: #{enc_inter_cnn2int_forward.3} parent=5 // pred_fallthru
        _
      %p108 = scmp.lt.s32.totalorder %s9, 2
      // Predicated region
      $region17: #{enc_inter_cnn2int_forward.3} parent=5 // pred_check
        %p109 = pneg %p108
      $region18: #{enc_inter_cnn2int_forward.3} parent=5 // pred_check_branch
        %111 = sbr.rel (%p109) target = $region20
      $region19: #{enc_inter_cnn2int_forward.3} parent=5 // pred_region
        // Predicated region
        $region21: #{enc_inter_cnn2int_forward.3} parent=19 // pred_check
          %p112 = pneg %p50
        $region22: #{enc_inter_cnn2int_forward.3} parent=19 // pred_check_branch
          %114 = sbr.rel (%p112) target = $region24
        $region23: #{enc_inter_cnn2int_forward.3} parent=19 // pred_region
          %s115 = smul.u32 2, %s9
          %p116 = scmp.lt.s32.totalorder %s115, 3
          %s117 = scalar_select %p116, %s115, 3
          %s118 = smul.addr %s117, 2
          %s119 = smul.addr %s118, 8
          %s120 = scalar_lea.vmem %s1, %s119
          %s121 = smul.u32 2, %s9
        $region24: #{enc_inter_cnn2int_forward.3} parent=19 // pred_fallthru
          _
      $region20: #{enc_inter_cnn2int_forward.3} parent=5 // pred_fallthru
        _
      %p122 = scmp.le.s32.totalorder 1, %s9
      %p123 = scmp.lt.s32.totalorder %s9, 3
      %p124 = pnand %p122, %p123
      %p125 = pneg %p124
      // Predicated region
      $region25: #{enc_inter_cnn2int_forward.3} parent=5 // pred_check
        _
      $region26: #{enc_inter_cnn2int_forward.3} parent=5 // pred_check_branch
        %127 = sbr.rel (%p124) target = $region28
      $region27: #{enc_inter_cnn2int_forward.3} parent=5 // pred_region
        %s128 = ssub.s32 %s9, 1
        // Predicated region
        $region29: #{enc_inter_cnn2int_forward.3} parent=27 // pred_check
          %p129 = pneg %p30
        $region30: #{enc_inter_cnn2int_forward.3} parent=27 // pred_check_branch
          %131 = sbr.rel (%p129) target = $region32
        $region31: #{enc_inter_cnn2int_forward.3} parent=27 // pred_region
          %132 = dma.done [#allocation3], 16
        $region32: #{enc_inter_cnn2int_forward.3} parent=27 // pred_fallthru
          _
        %133 = sfence
        %p134 = pneg %p30
        %p135 = pneg %p27
        %s136 = smul.u32 2, %s14
        %p137 = scmp.lt.s32.totalorder %s136, 3
        %s138 = scalar_select %p137, %s136, 3
        %s139 = smul.addr %s138, 2
        %s140 = smul.addr %s139, 8
        %s141 = scalar_lea.vmem %s1, %s140
        %p142 = pneg %p56
        %p143 = pneg %p53
        %p144 = pneg %p82
        %p145 = pneg %p79
        %s146 = smul.u32 2, %s14
        %p147 = scmp.lt.s32.totalorder %s146, 3
        %s148 = scalar_select %p147, %s146, 3
        %s149 = smul.addr %s148, 2
        %s150 = smul.addr %s149, 8
        %s151 = scalar_lea.vmem %s2, %s150
        %s152 = smul.u32 2, %s14
        %p153 = scmp.lt.s32.totalorder %s152, 3
        %s154 = scalar_select %p153, %s152, 3
        %s155 = smul.addr %s154, 2
        %s156 = smul.addr %s155, 8
        %s157 = scalar_lea.vmem %s1, %s156
        %s158 = smul.u32 2, %s14
        %s159 = smul.u32 2, %s14
        %p160 = scmp.lt.s32.totalorder %s159, 3
        %s161 = scalar_select %p160, %s159, 3
        %s162 = smul.addr %s161, 2
        %s163 = smul.addr %s162, 8
        %s164 = scalar_lea.vmem %s2, %s163
        %s165 = smul.u32 2, %s14
        %s166 = sld [smem:[#allocation2]]
        %s167 = sld [smem:[#allocation2 + $0x1]]
        %v168 = vld [vmem:[%s157] sm:$0xff]
        %v169 = vld [vmem:[%s157 + $0x8] sm:$0xff]
        %v170 = vld [vmem:[%s157 + $0x10] sm:$0xff]
        %v171 = vld [vmem:[%s157 + $0x18] sm:$0xff]
        %v172 = vstv %s166
        %v173 = vsub.f32 %v168, %v172
        %v174 = vsub.f32 %v169, %v172
        %v175 = vsub.f32 %v170, %v172
        %v176 = vsub.f32 %v171, %v172
        %v177 = vstv %s167
        %v178 = vmul.f32 %v173, %v177
        %v179 = vmul.f32 %v174, %v177
        %v180 = vmul.f32 %v175, %v177
        %v181 = vmul.f32 %v176, %v177
        %vm182 = vcmask 23552
        %183 = vst.msk [vmem:[%s164] sm:$0xff] %vm182, %v178
        %184 = vst.msk [vmem:[%s164 + $0x8] sm:$0xff] %vm182, %v179
        %185 = vst.msk [vmem:[%s164 + $0x10] sm:$0xff] %vm182, %v180
        %186 = vst.msk [vmem:[%s164 + $0x18] sm:$0xff] %vm182, %v181
        %s187 = smul.u32 2, %s14
        %p188 = scmp.lt.s32.totalorder %s187, 3
        %s189 = scalar_select %p188, %s187, 3
        %s190 = smul.addr %s189, 2
        %s191 = smul.addr %s190, 8
        %s192 = scalar_lea.vmem %s2, %s191
        // Predicated region
        $region33: #{enc_inter_cnn2int_forward.3} parent=27 // pred_check
          %p193 = pneg %p79
        $region34: #{enc_inter_cnn2int_forward.3} parent=27 // pred_check_branch
          %195 = sbr.rel (%p193) target = $region36
        $region35: #{enc_inter_cnn2int_forward.3} parent=27 // pred_region
          %s196 = smul.u32 2, %s14
        $region36: #{enc_inter_cnn2int_forward.3} parent=27 // pred_fallthru
          _
      $region28: #{enc_inter_cnn2int_forward.3} parent=5 // pred_fallthru
        _
      %p197 = scmp.le.s32.totalorder 2, %s9
      // Predicated region
      $region37: #{enc_inter_cnn2int_forward.3} parent=5 // pred_check
        %p198 = pneg %p197
      $region38: #{enc_inter_cnn2int_forward.3} parent=5 // pred_check_branch
        %200 = sbr.rel (%p198) target = $region40
      $region39: #{enc_inter_cnn2int_forward.3} parent=5 // pred_region
        %s201 = ssub.s32 %s9, 2
        // Predicated region
        $region41: #{enc_inter_cnn2int_forward.3} parent=39 // pred_check
          %p202 = pneg %p85
        $region42: #{enc_inter_cnn2int_forward.3} parent=39 // pred_check_branch
          %204 = sbr.rel (%p202) target = $region44
        $region43: #{enc_inter_cnn2int_forward.3} parent=39 // pred_region
          %s205 = smul.u32 2, %s15
          %p206 = scmp.lt.s32.totalorder %s205, 3
          %s207 = scalar_select %p206, %s205, 3
          %s208 = smul.addr %s207, 2
          %s209 = smul.addr %s208, 8
          %s210 = scalar_lea.vmem %s2, %s209
        $region44: #{enc_inter_cnn2int_forward.3} parent=39 // pred_fallthru
          _
      $region40: #{enc_inter_cnn2int_forward.3} parent=5 // pred_fallthru
        _
    $region6: #{enc_inter_cnn2int_forward.3} parent=1 // loop_footer
      %s13 = sadd.s32 1, %s9
    $region7: #{enc_inter_cnn2int_forward.3} parent=1 // loop_footer_branch
      %8 = sbr.rel target = $region3
    $region8: #{enc_inter_cnn2int_forward.3} parent=1 // loop_exit
      _
    %211 = vsyncpa [#allocation3], 1
    %s212 = scalar_lea.sflag [#allocation3], 1
    %213 = vsyncpa %s212, 1

// kernel: enc_inter_cnn2int_forward.2
$region0: #{enc_inter_cnn2int_forward.2}
  #allocation0 [shape = 'u32[]', space=smem, size = 0x4, offset = 0x4, fixed_abs, tag = 'smem constant byte address 0x4 - core index']
  #allocation1 [shape = 'u32[144,128]{1,0:T(1,128)}', space=vmem, size = 0x12000, scoped, tag = 'internal scratch']
  #allocation2 [shape = 'f32[2,20,128]{2,1,0:T(8,128)}', space=vmem, size = 0x6000, scoped, tag = 'scratch operand']
  %s0 = inlined_call_operand.vmem [shape: f32[4,16,3], index: 0, kind: input, shape index: {}]
  %s1 = inlined_call_operand.vmem [shape: f32[5,3,128], index: 1, kind: input, shape index: {}]
  %s2 = inlined_call_operand.vmem [shape: f32[1,128], index: 2, kind: input, shape index: {}]
  %s3 = inlined_call_operand.vmem [shape: f32[1,5,128,128], index: 3, kind: input, shape index: {}]
  %s4 = inlined_call_operand.vmem [shape: f32[1,1,128], index: 4, kind: input, shape index: {}]
  %s5 = inlined_call_operand.vmem [shape: f32[128,3], index: 5, kind: input, shape index: {}]
  %s6 = inlined_call_operand.vmem [shape: f32[1,3], index: 6, kind: input, shape index: {}]
  %s7 = inlined_call_operand.vmem [shape: f32[4,16,3], index: 7, kind: output, shape index: {0}]
  %s8 = inlined_call_operand.vmem [shape: f32[2,2,8,128], index: 8, kind: output, shape index: {1}]
  %9 = xla_tuple %s7, %s8
  %s10 = sld [smem:[#allocation0]]
  $region69: #{enc_inter_cnn2int_forward.2} parent=0
    _
  %s12 = ssub.s32 1, %s10
  %s13 = scalar_select 0, %s12, %s10
  loop: start=0, step=1, limit=4
  $region2: #{enc_inter_cnn2int_forward.2} parent=0 // loop_pre_header
    _
  $region3: #{enc_inter_cnn2int_forward.2} parent=0 // loop_header
    %s15 = sphi 0, %s19
    %p16 = scmp.ge.s32.totalorder %s15, 4
    %s25 = sphi 0, %s27
    %s28 = sphi 0, %s25
    %s29 = sphi 0, %s28
    %s45 = sphi 0, %s29
    %s49 = sphi 0, %s49
    %s51 = sphi 0, %s49
    %s52 = sphi 0, %s51
    %s66 = sphi 0, %s52
    %s70 = sphi 0, %s70
    %s72 = sphi 0, %s70
    %s73 = sphi 0, %s72
    %s87 = sphi 0, %s73
    %s91 = sphi 0, %s91
    %s93 = sphi 0, %s91
    %s94 = sphi 0, %s93
    %s108 = sphi 0, %s94
    %s112 = sphi 0, %s112
    %s114 = sphi 0, %s112
    %s115 = sphi 0, %s114
    %s129 = sphi 0, %s115
    %s133 = sphi 0, %s133
    %s135 = sphi 0, %s133
    %s136 = sphi 0, %s135
    %s150 = sphi 0, %s136
    %s154 = sphi 0, %s154
    %s156 = sphi 0, %s154
    %s157 = sphi 0, %s156
    %s171 = sphi 0, %s157
    %s177 = sphi 0, %s179
    %s180 = sphi 0, %s177
    %s181 = sphi 0, %s180
    %s197 = sphi 0, %s181
    %s203 = sphi 0, %s205
    %s206 = sphi 0, %s203
    %s207 = sphi 0, %s206
    %s223 = sphi 0, %s207
  $region4: #{enc_inter_cnn2int_forward.2} parent=0 // loop_header_branch
    %18 = sbr.rel (%p16) target = $region8
  $region5: #{enc_inter_cnn2int_forward.2} parent=0 // loop_body
    %s20 = ssub.s32 %s15, 1
    %s21 = ssub.s32 %s15, 2
    %s22 = sadd.s32 %s15, 1
    %s23 = ssub.s32 %s15, %s22
    %p24 = scmp.eq.s32.totalorder %s23, 0
    %s26 = sadd.s32 %s25, 1
    %s27 = scalar_select %p24, %s25, %s26
    %p30 = pneg %p24
    %p31 = scmp.eq.s32.totalorder %s15, 1
    %p32 = por %p30, %p31
    %p33 = scmp.ne.s32.totalorder %s25, %s28
    %p34 = scmp.eq.s32.totalorder %s15, 0
    %p35 = por %p33, %p34
    %p36 = scmp.ne.s32.totalorder %s25, %s28
    %p37 = scmp.eq.s32.totalorder %s20, 1
    %p38 = por %p36, %p37
    %p39 = scmp.ne.s32.totalorder %s28, %s29
    %p40 = scmp.eq.s32.totalorder %s20, 0
    %p41 = por %p39, %p40
    %p42 = scmp.ne.s32.totalorder %s28, %s29
    %p43 = scmp.eq.s32.totalorder %s21, 1
    %p44 = por %p42, %p43
    %p46 = scmp.ne.s32.totalorder %s29, %s45
    %p47 = scmp.eq.s32.totalorder %s21, 0
    %p48 = por %p46, %p47
    %s50 = sadd.s32 %s49, 1
    %p53 = scmp.eq.s32.totalorder %s15, 1
    %p54 = scmp.ne.s32.totalorder %s49, %s51
    %p55 = scmp.eq.s32.totalorder %s15, 0
    %p56 = por %p54, %p55
    %p57 = scmp.ne.s32.totalorder %s49, %s51
    %p58 = scmp.eq.s32.totalorder %s20, 1
    %p59 = por %p57, %p58
    %p60 = scmp.ne.s32.totalorder %s51, %s52
    %p61 = scmp.eq.s32.totalorder %s20, 0
    %p62 = por %p60, %p61
    %p63 = scmp.ne.s32.totalorder %s51, %s52
    %p64 = scmp.eq.s32.totalorder %s21, 1
    %p65 = por %p63, %p64
    %p67 = scmp.ne.s32.totalorder %s52, %s66
    %p68 = scmp.eq.s32.totalorder %s21, 0
    %p69 = por %p67, %p68
    %s71 = sadd.s32 %s70, 1
    %p74 = scmp.eq.s32.totalorder %s15, 1
    %p75 = scmp.ne.s32.totalorder %s70, %s72
    %p76 = scmp.eq.s32.totalorder %s15, 0
    %p77 = por %p75, %p76
    %p78 = scmp.ne.s32.totalorder %s70, %s72
    %p79 = scmp.eq.s32.totalorder %s20, 1
    %p80 = por %p78, %p79
    %p81 = scmp.ne.s32.totalorder %s72, %s73
    %p82 = scmp.eq.s32.totalorder %s20, 0
    %p83 = por %p81, %p82
    %p84 = scmp.ne.s32.totalorder %s72, %s73
    %p85 = scmp.eq.s32.totalorder %s21, 1
    %p86 = por %p84, %p85
    %p88 = scmp.ne.s32.totalorder %s73, %s87
    %p89 = scmp.eq.s32.totalorder %s21, 0
    %p90 = por %p88, %p89
    %s92 = sadd.s32 %s91, 1
    %p95 = scmp.eq.s32.totalorder %s15, 1
    %p96 = scmp.ne.s32.totalorder %s91, %s93
    %p97 = scmp.eq.s32.totalorder %s15, 0
    %p98 = por %p96, %p97
    %p99 = scmp.ne.s32.totalorder %s91, %s93
    %p100 = scmp.eq.s32.totalorder %s20, 1
    %p101 = por %p99, %p100
    %p102 = scmp.ne.s32.totalorder %s93, %s94
    %p103 = scmp.eq.s32.totalorder %s20, 0
    %p104 = por %p102, %p103
    %p105 = scmp.ne.s32.totalorder %s93, %s94
    %p106 = scmp.eq.s32.totalorder %s21, 1
    %p107 = por %p105, %p106
    %p109 = scmp.ne.s32.totalorder %s94, %s108
    %p110 = scmp.eq.s32.totalorder %s21, 0
    %p111 = por %p109, %p110
    %s113 = sadd.s32 %s112, 1
    %p116 = scmp.eq.s32.totalorder %s15, 1
    %p117 = scmp.ne.s32.totalorder %s112, %s114
    %p118 = scmp.eq.s32.totalorder %s15, 0
    %p119 = por %p117, %p118
    %p120 = scmp.ne.s32.totalorder %s112, %s114
    %p121 = scmp.eq.s32.totalorder %s20, 1
    %p122 = por %p120, %p121
    %p123 = scmp.ne.s32.totalorder %s114, %s115
    %p124 = scmp.eq.s32.totalorder %s20, 0
    %p125 = por %p123, %p124
    %p126 = scmp.ne.s32.totalorder %s114, %s115
    %p127 = scmp.eq.s32.totalorder %s21, 1
    %p128 = por %p126, %p127
    %p130 = scmp.ne.s32.totalorder %s115, %s129
    %p131 = scmp.eq.s32.totalorder %s21, 0
    %p132 = por %p130, %p131
    %s134 = sadd.s32 %s133, 1
    %p137 = scmp.eq.s32.totalorder %s15, 1
    %p138 = scmp.ne.s32.totalorder %s133, %s135
    %p139 = scmp.eq.s32.totalorder %s15, 0
    %p140 = por %p138, %p139
    %p141 = scmp.ne.s32.totalorder %s133, %s135
    %p142 = scmp.eq.s32.totalorder %s20, 1
    %p143 = por %p141, %p142
    %p144 = scmp.ne.s32.totalorder %s135, %s136
    %p145 = scmp.eq.s32.totalorder %s20, 0
    %p146 = por %p144, %p145
    %p147 = scmp.ne.s32.totalorder %s135, %s136
    %p148 = scmp.eq.s32.totalorder %s21, 1
    %p149 = por %p147, %p148
    %p151 = scmp.ne.s32.totalorder %s136, %s150
    %p152 = scmp.eq.s32.totalorder %s21, 0
    %p153 = por %p151, %p152
    %s155 = sadd.s32 %s154, 1
    %p158 = scmp.eq.s32.totalorder %s15, 1
    %p159 = scmp.ne.s32.totalorder %s154, %s156
    %p160 = scmp.eq.s32.totalorder %s15, 0
    %p161 = por %p159, %p160
    %p162 = scmp.ne.s32.totalorder %s154, %s156
    %p163 = scmp.eq.s32.totalorder %s20, 1
    %p164 = por %p162, %p163
    %p165 = scmp.ne.s32.totalorder %s156, %s157
    %p166 = scmp.eq.s32.totalorder %s20, 0
    %p167 = por %p165, %p166
    %p168 = scmp.ne.s32.totalorder %s156, %s157
    %p169 = scmp.eq.s32.totalorder %s21, 1
    %p170 = por %p168, %p169
    %p172 = scmp.ne.s32.totalorder %s157, %s171
    %p173 = scmp.eq.s32.totalorder %s21, 0
    %p174 = por %p172, %p173
    %s175 = ssub.s32 %s15, %s22
    %p176 = scmp.eq.s32.totalorder %s175, 0
    %s178 = sadd.s32 %s177, 1
    %s179 = scalar_select %p176, %s177, %s178
    %p182 = pneg %p176
    %p183 = scmp.eq.s32.totalorder %s15, 1
    %p184 = por %p182, %p183
    %p185 = scmp.ne.s32.totalorder %s177, %s180
    %p186 = scmp.eq.s32.totalorder %s15, 0
    %p187 = por %p185, %p186
    %p188 = scmp.ne.s32.totalorder %s177, %s180
    %p189 = scmp.eq.s32.totalorder %s20, 1
    %p190 = por %p188, %p189
    %p191 = scmp.ne.s32.totalorder %s180, %s181
    %p192 = scmp.eq.s32.totalorder %s20, 0
    %p193 = por %p191, %p192
    %p194 = scmp.ne.s32.totalorder %s180, %s181
    %p195 = scmp.eq.s32.totalorder %s21, 1
    %p196 = por %p194, %p195
    %p198 = scmp.ne.s32.totalorder %s181, %s197
    %p199 = scmp.eq.s32.totalorder %s21, 0
    %p200 = por %p198, %p199
    %s201 = ssub.s32 %s15, %s22
    %p202 = scmp.eq.s32.totalorder %s201, 0
    %s204 = sadd.s32 %s203, 1
    %s205 = scalar_select %p202, %s203, %s204
    %p208 = pneg %p202
    %p209 = scmp.eq.s32.totalorder %s15, 1
    %p210 = por %p208, %p209
    %p211 = scmp.ne.s32.totalorder %s203, %s206
    %p212 = scmp.eq.s32.totalorder %s15, 0
    %p213 = por %p211, %p212
    %p214 = scmp.ne.s32.totalorder %s203, %s206
    %p215 = scmp.eq.s32.totalorder %s20, 1
    %p216 = por %p214, %p215
    %p217 = scmp.ne.s32.totalorder %s206, %s207
    %p218 = scmp.eq.s32.totalorder %s20, 0
    %p219 = por %p217, %p218
    %p220 = scmp.ne.s32.totalorder %s206, %s207
    %p221 = scmp.eq.s32.totalorder %s21, 1
    %p222 = por %p220, %p221
    %p224 = scmp.ne.s32.totalorder %s207, %s223
    %p225 = scmp.eq.s32.totalorder %s21, 0
    %p226 = por %p224, %p225
    %p227 = scmp.le.s32.totalorder 1, %s15
    %p228 = scmp.lt.s32.totalorder %s15, 3
    %p229 = pnand %p227, %p228
    %p230 = pneg %p229
    // Predicated region
    $region9: #{enc_inter_cnn2int_forward.2} parent=5 // pred_check
      _
    $region10: #{enc_inter_cnn2int_forward.2} parent=5 // pred_check_branch
      %232 = sbr.rel (%p229) target = $region12
    $region11: #{enc_inter_cnn2int_forward.2} parent=5 // pred_region
      %s233 = ssub.s32 %s15, 1
      // Predicated region
      $region13: #{enc_inter_cnn2int_forward.2} parent=11 // pred_check
        %p234 = pneg %p62
      $region14: #{enc_inter_cnn2int_forward.2} parent=11 // pred_check_branch
        %236 = sbr.rel (%p234) target = $region16
      $region15: #{enc_inter_cnn2int_forward.2} parent=11 // pred_region
        _
      $region16: #{enc_inter_cnn2int_forward.2} parent=11 // pred_fallthru
        _
      // Predicated region
      $region17: #{enc_inter_cnn2int_forward.2} parent=11 // pred_check
        %p237 = pneg %p83
      $region18: #{enc_inter_cnn2int_forward.2} parent=11 // pred_check_branch
        %239 = sbr.rel (%p237) target = $region20
      $region19: #{enc_inter_cnn2int_forward.2} parent=11 // pred_region
        _
      $region20: #{enc_inter_cnn2int_forward.2} parent=11 // pred_fallthru
        _
      // Predicated region
      $region21: #{enc_inter_cnn2int_forward.2} parent=11 // pred_check
        %p240 = pneg %p104
      $region22: #{enc_inter_cnn2int_forward.2} parent=11 // pred_check_branch
        %242 = sbr.rel (%p240) target = $region24
      $region23: #{enc_inter_cnn2int_forward.2} parent=11 // pred_region
        _
      $region24: #{enc_inter_cnn2int_forward.2} parent=11 // pred_fallthru
        _
      // Predicated region
      $region25: #{enc_inter_cnn2int_forward.2} parent=11 // pred_check
        %p243 = pneg %p125
      $region26: #{enc_inter_cnn2int_forward.2} parent=11 // pred_check_branch
        %245 = sbr.rel (%p243) target = $region28
      $region27: #{enc_inter_cnn2int_forward.2} parent=11 // pred_region
        _
      $region28: #{enc_inter_cnn2int_forward.2} parent=11 // pred_fallthru
        _
      // Predicated region
      $region29: #{enc_inter_cnn2int_forward.2} parent=11 // pred_check
        %p246 = pneg %p146
      $region30: #{enc_inter_cnn2int_forward.2} parent=11 // pred_check_branch
        %248 = sbr.rel (%p246) target = $region32
      $region31: #{enc_inter_cnn2int_forward.2} parent=11 // pred_region
        _
      $region32: #{enc_inter_cnn2int_forward.2} parent=11 // pred_fallthru
        _
      // Predicated region
      $region33: #{enc_inter_cnn2int_forward.2} parent=11 // pred_check
        %p249 = pneg %p167
      $region34: #{enc_inter_cnn2int_forward.2} parent=11 // pred_check_branch
        %251 = sbr.rel (%p249) target = $region36
      $region35: #{enc_inter_cnn2int_forward.2} parent=11 // pred_region
        _
      $region36: #{enc_inter_cnn2int_forward.2} parent=11 // pred_fallthru
        _
    $region12: #{enc_inter_cnn2int_forward.2} parent=5 // pred_fallthru
      _
    %p252 = scmp.lt.s32.totalorder %s15, 2
    // Predicated region
    $region37: #{enc_inter_cnn2int_forward.2} parent=5 // pred_check
      %p253 = pneg %p252
    $region38: #{enc_inter_cnn2int_forward.2} parent=5 // pred_check_branch
      %255 = sbr.rel (%p253) target = $region40
    $region39: #{enc_inter_cnn2int_forward.2} parent=5 // pred_region
      // Predicated region
      $region41: #{enc_inter_cnn2int_forward.2} parent=39 // pred_check
        %p256 = pneg %p35
      $region42: #{enc_inter_cnn2int_forward.2} parent=39 // pred_check_branch
        %258 = sbr.rel (%p256) target = $region44
      $region43: #{enc_inter_cnn2int_forward.2} parent=39 // pred_region
        %s259 = smul.u32 2, %s15
        %p260 = scmp.lt.s32.totalorder %s259, 3
        %s261 = scalar_select %p260, %s259, 3
        %s262 = smul.addr %s261, 2
        %s263 = smul.addr %s262, 8
        %s264 = scalar_lea.vmem %s0, %s263
        %s265 = smul.u32 2, %s15
      $region44: #{enc_inter_cnn2int_forward.2} parent=39 // pred_fallthru
        _
    $region40: #{enc_inter_cnn2int_forward.2} parent=5 // pred_fallthru
      _
    %p266 = scmp.le.s32.totalorder 1, %s15
    %p267 = scmp.lt.s32.totalorder %s15, 3
    %p268 = pnand %p266, %p267
    %p269 = pneg %p268
    // Predicated region
    $region45: #{enc_inter_cnn2int_forward.2} parent=5 // pred_check
      _
    $region46: #{enc_inter_cnn2int_forward.2} parent=5 // pred_check_branch
      %271 = sbr.rel (%p268) target = $region48
    $region47: #{enc_inter_cnn2int_forward.2} parent=5 // pred_region
      %s272 = ssub.s32 %s15, 1
      %s273 = smul.u32 2, %s20
      %p274 = scmp.lt.s32.totalorder %s273, 3
      %s275 = scalar_select %p274, %s273, 3
      %s276 = smul.addr %s275, 2
      %s277 = smul.addr %s276, 8
      %s278 = scalar_lea.vmem %s0, %s277
      %p279 = pneg %p41
      %p280 = pneg %p38
      %p281 = pneg %p62
      %p282 = pneg %p59
      %p283 = pneg %p83
      %p284 = pneg %p80
      %p285 = pneg %p104
      %p286 = pneg %p101
      %p287 = pneg %p125
      %p288 = pneg %p122
      %p289 = pneg %p146
      %p290 = pneg %p143
      %p291 = pneg %p167
      %p292 = pneg %p164
      %p293 = pneg %p193
      %p294 = pneg %p190
      %s295 = smul.u32 2, %s20
      %p296 = scmp.lt.s32.totalorder %s295, 3
      %s297 = scalar_select %p296, %s295, 3
      %s298 = smul.addr %s297, 2
      %s299 = smul.addr %s298, 8
      %s300 = scalar_lea.vmem %s7, %s299
      %p301 = pneg %p219
      %p302 = pneg %p216
      %p303 = scmp.lt.s32.totalorder %s20, 1
      %s304 = scalar_select %p303, %s20, 1
      %s305 = smul.addr %s304, 2
      %s306 = smul.addr %s305, 8
      %s307 = scalar_lea.vmem %s8, %s306
      %s308 = smul.u32 2, %s20
      %p309 = scmp.lt.s32.totalorder %s308, 3
      %s310 = scalar_select %p309, %s308, 3
      %s311 = smul.addr %s310, 2
      %s312 = smul.addr %s311, 8
      %s313 = scalar_lea.vmem %s0, %s312
      %s314 = smul.u32 2, %s20
      %s315 = smul.u32 2, %s20
      %p316 = scmp.lt.s32.totalorder %s315, 3
      %s317 = scalar_select %p316, %s315, 3
      %s318 = smul.addr %s317, 2
      %s319 = smul.addr %s318, 8
      %s320 = scalar_lea.vmem %s7, %s319
      %s321 = smul.u32 2, %s20
      %p322 = scmp.lt.s32.totalorder %s20, 1
      %s323 = scalar_select %p322, %s20, 1
      %s324 = smul.addr %s323, 2
      %s325 = smul.addr %s324, 8
      %s326 = scalar_lea.vmem %s8, %s325
      %v327 = vld [vmem:[%s313] sm:$0xff]
      %v328 = vld [vmem:[%s313 + $0x8] sm:$0xff]
      %v329 = vld [vmem:[%s313 + $0x10] sm:$0xff]
      %v330 = vld [vmem:[%s313 + $0x18] sm:$0xff]
      %v331 = vmul.f32 %v327, 2.0
      %v332 = vmul.f32 %v328, 2.0
      %v333 = vmul.f32 %v329, 2.0
      %v334 = vmul.f32 %v330, 2.0
      %v335 = vsub.f32 %v331, 1.0
      %v336 = vsub.f32 %v332, 1.0
      %v337 = vsub.f32 %v333, 1.0
      %v338 = vsub.f32 %v334, 1.0
      %vm343 = vcmask 1041408
      %v344 = vrot.slane %v335, 6
      %v345 = vrot.slane %v336, 6
      %v346 = vsel %vm343, %v344, %v345
      %v347 = vrot.slane %v337, 6
      %v348 = vrot.slane %v338, 6
      %v349 = vsel %vm343, %v347, %v348
      %v354 = vsel %vm343, 0.0, %v344
      %v355 = vsel %vm343, 0.0, %v347
      %v356 = vsel %vm343, %v345, 0.0
      %v357 = vsel %vm343, %v348, 0.0
      %v358 = vld [vmem:[%s2] sm:$0x1]
      %v360 = vlaneseq
      %v361 = vshrl.u32 %v360, 7
      %v362 = vsub.s32 0, %v361
      %v363 = vrot.slane %v358, %v362
      %v365 = vadd.f32 %v363, 0.0
      %v366 = vld [vmem:[%s1] sm:$0x7]
      %vm367 = vcmask 23552
      %v369 = vsel %vm367, %v354, 0
      %v371 = vsel %vm367, %v346, 0
      %v374 = vsel %vm367, %v355, 0
      %v376 = vsel %vm367, %v349, 0
      %vm378 = vcmask 1042432
      %v380 = vsel %vm378, %v366, 0
      %382 = vmatprep.subr.mxu0 0.0
      %383 = vmatpush1.msra.mxu0 0.0
      %384 = vmatprep.subr.mxu0 0.0
      %385 = vmatpush1.msra.mxu0 0.0
      %386 = vmatprep.subr.mxu0 0.0
      %387 = vmatpush1.msra.mxu0 0.0
      %388 = vmatprep.subr.mxu0 0.0
      %389 = vmatpush1.msra.mxu0 0.0
      %390 = vmatprep.subr.mxu0 0.0
      %391 = vmatpush1.msra.mxu0 0.0
      %392 = vmatprep.subr.mxu0 0.0
      %393 = vmatpush1.msra.mxu0 0.0
      %394 = vmatprep.subr.mxu0 0.0
      %395 = vmatpush1.msra.mxu0 0.0
      %396 = vmatprep.subr.mxu0 0.0
      %397 = vmatpush1.msra.mxu0 0.0
      %398 = vmatprep.subr.mxu0 0.0
      %399 = vmatpush1.msra.mxu0 0.0
      %400 = vmatprep.subr.mxu0 0.0
      %401 = vmatpush1.msra.mxu0 0.0
      %402 = vmatprep.subr.mxu0 0.0
      %403 = vmatpush1.msra.mxu0 0.0
      %404 = vmatprep.subr.mxu0 0.0
      %405 = vmatpush1.msra.mxu0 0.0
      %406 = vmatprep.subr.mxu0 0.0
      %407 = vmatpush1.msra.mxu0 0.0
      %408 = vmatprep.subr.mxu0 0.0
      %409 = vmatpush1.msra.mxu0 0.0
      %410 = vmatprep.subr.mxu0 0.0
      %411 = vmatpush1.msra.mxu0 0.0
      %412 = vmatprep.subr.mxu0 0.0
      %413 = vmatpush1.msra.mxu0 %v380
      %414 = vmatprep.subr.mxu0 0.0
      %415 = vmatpush2.msra.mxu0 0.0
      %416 = vmatprep.subr.mxu0 0.0
      %417 = vmatpush2.msra.mxu0 0.0
      %418 = vmatprep.subr.mxu0 0.0
      %419 = vmatpush2.msra.mxu0 0.0
      %420 = vmatprep.subr.mxu0 0.0
      %421 = vmatpush2.msra.mxu0 0.0
      %422 = vmatprep.subr.mxu0 0.0
      %423 = vmatpush2.msra.mxu0 0.0
      %424 = vmatprep.subr.mxu0 0.0
      %425 = vmatpush2.msra.mxu0 0.0
      %426 = vmatprep.subr.mxu0 0.0
      %427 = vmatpush2.msra.mxu0 0.0
      %428 = vmatprep.subr.mxu0 0.0
      %429 = vmatpush2.msra.mxu0 0.0
      %430 = vmatprep.subr.mxu0 0.0
      %431 = vmatpush2.msra.mxu0 0.0
      %432 = vmatprep.subr.mxu0 0.0
      %433 = vmatpush2.msra.mxu0 0.0
      %434 = vmatprep.subr.mxu0 0.0
      %435 = vmatpush2.msra.mxu0 0.0
      %436 = vmatprep.subr.mxu0 0.0
      %437 = vmatpush2.msra.mxu0 0.0
      %438 = vmatprep.subr.mxu0 0.0
      %439 = vmatpush2.msra.mxu0 0.0
      %440 = vmatprep.subr.mxu0 0.0
      %441 = vmatpush2.msra.mxu0 0.0
      %442 = vmatprep.subr.mxu0 0.0
      %443 = vmatpush2.msra.mxu0 0.0
      %444 = vmatprep.subr.mxu0 0.0
      %445 = vmatpush2.msra.mxu0 0.0
      %446 = vmatprep.mubr.f32.mxu0 0.0
      %447 = vmatmul.mubr.f32.gmra.mxu0 %v369
      %v448 = vpop.f32.mrf.mxu0
      %v449 = vadd.f32 0.0, %v448
      %v450 = vpop.f32.mrf.mxu0
      %451 = vmatprep.mubr.f32.mxu0 0.0
      %452 = vmatmul.mubr.f32.gmra.mxu0 %v371
      %v453 = vpop.f32.mrf.mxu0
      %v454 = vadd.f32 0.0, %v453
      %v455 = vpop.f32.mrf.mxu0
      %456 = vmatprep.mubr.f32.mxu0 0.0
      %457 = vmatmul.mubr.f32.gmra.mxu0 %v374
      %v458 = vpop.f32.mrf.mxu0
      %v459 = vadd.f32 0.0, %v458
      %v460 = vpop.f32.mrf.mxu0
      %461 = vmatprep.mubr.f32.mxu0 0.0
      %462 = vmatmul.mubr.f32.gmra.mxu0 %v376
      %v463 = vpop.f32.mrf.mxu0
      %v464 = vadd.f32 0.0, %v463
      %v465 = vpop.f32.mrf.mxu0
      %466 = vdwg.mxu0
      %v467 = vadd.f32 %v365, %v449
      %v468 = vadd.f32 %v365, %v454
      %v469 = vadd.f32 %v365, %v459
      %v470 = vadd.f32 %v365, %v464
      %vm473 = vcmask 1046528
      %v474 = vrot.slane %v354, 1
      %v475 = vrot.slane %v346, 1
      %v476 = vsel %vm473, %v474, %v475
      %v477 = vrot.slane %v356, 1
      %v478 = vsel %vm473, %v475, %v477
      %v479 = vrot.slane %v355, 1
      %v480 = vrot.slane %v349, 1
      %v481 = vsel %vm473, %v479, %v480
      %v482 = vrot.slane %v357, 1
      %v483 = vsel %vm473, %v480, %v482
      %s484 = scalar_lea.vmem %s1, 4
      %v485 = vld [vmem:[%s484] sm:$0x7]
      %v486 = vsel %vm367, %v476, 0
      %v488 = vsel %vm367, %v478, 0
      %v490 = vsel %vm367, %v481, 0
      %v492 = vsel %vm367, %v483, 0
      %v495 = vsel %vm378, %v485, 0
      %497 = vmatprep.subr.mxu0 0.0
      %498 = vmatpush1.msra.mxu0 0.0
      %499 = vmatprep.subr.mxu0 0.0
      %500 = vmatpush1.msra.mxu0 0.0
      %501 = vmatprep.subr.mxu0 0.0
      %502 = vmatpush1.msra.mxu0 0.0
      %503 = vmatprep.subr.mxu0 0.0
      %504 = vmatpush1.msra.mxu0 0.0
      %505 = vmatprep.subr.mxu0 0.0
      %506 = vmatpush1.msra.mxu0 0.0
      %507 = vmatprep.subr.mxu0 0.0
      %508 = vmatpush1.msra.mxu0 0.0
      %509 = vmatprep.subr.mxu0 0.0
      %510 = vmatpush1.msra.mxu0 0.0
      %511 = vmatprep.subr.mxu0 0.0
      %512 = vmatpush1.msra.mxu0 0.0
      %513 = vmatprep.subr.mxu0 0.0
      %514 = vmatpush1.msra.mxu0 0.0
      %515 = vmatprep.subr.mxu0 0.0
      %516 = vmatpush1.msra.mxu0 0.0
      %517 = vmatprep.subr.mxu0 0.0
      %518 = vmatpush1.msra.mxu0 0.0
      %519 = vmatprep.subr.mxu0 0.0
      %520 = vmatpush1.msra.mxu0 0.0
      %521 = vmatprep.subr.mxu0 0.0
      %522 = vmatpush1.msra.mxu0 0.0
      %523 = vmatprep.subr.mxu0 0.0
      %524 = vmatpush1.msra.mxu0 0.0
      %525 = vmatprep.subr.mxu0 0.0
      %526 = vmatpush1.msra.mxu0 0.0
      %527 = vmatprep.subr.mxu0 0.0
      %528 = vmatpush1.msra.mxu0 %v495
      %529 = vmatprep.subr.mxu0 0.0
      %530 = vmatpush2.msra.mxu0 0.0
      %531 = vmatprep.subr.mxu0 0.0
      %532 = vmatpush2.msra.mxu0 0.0
      %533 = vmatprep.subr.mxu0 0.0
      %534 = vmatpush2.msra.mxu0 0.0
      %535 = vmatprep.subr.mxu0 0.0
      %536 = vmatpush2.msra.mxu0 0.0
      %537 = vmatprep.subr.mxu0 0.0
      %538 = vmatpush2.msra.mxu0 0.0
      %539 = vmatprep.subr.mxu0 0.0
      %540 = vmatpush2.msra.mxu0 0.0
      %541 = vmatprep.subr.mxu0 0.0
      %542 = vmatpush2.msra.mxu0 0.0
      %543 = vmatprep.subr.mxu0 0.0
      %544 = vmatpush2.msra.mxu0 0.0
      %545 = vmatprep.subr.mxu0 0.0
      %546 = vmatpush2.msra.mxu0 0.0
      %547 = vmatprep.subr.mxu0 0.0
      %548 = vmatpush2.msra.mxu0 0.0
      %549 = vmatprep.subr.mxu0 0.0
      %550 = vmatpush2.msra.mxu0 0.0
      %551 = vmatprep.subr.mxu0 0.0
      %552 = vmatpush2.msra.mxu0 0.0
      %553 = vmatprep.subr.mxu0 0.0
      %554 = vmatpush2.msra.mxu0 0.0
      %555 = vmatprep.subr.mxu0 0.0
      %556 = vmatpush2.msra.mxu0 0.0
      %557 = vmatprep.subr.mxu0 0.0
      %558 = vmatpush2.msra.mxu0 0.0
      %559 = vmatprep.subr.mxu0 0.0
      %560 = vmatpush2.msra.mxu0 0.0
      %561 = vmatprep.mubr.f32.mxu0 0.0
      %562 = vmatmul.mubr.f32.gmra.mxu0 %v486
      %v563 = vpop.f32.mrf.mxu0
      %v564 = vadd.f32 0.0, %v563
      %v565 = vpop.f32.mrf.mxu0
      %566 = vmatprep.mubr.f32.mxu0 0.0
      %567 = vmatmul.mubr.f32.gmra.mxu0 %v488
      %v568 = vpop.f32.mrf.mxu0
      %v569 = vadd.f32 0.0, %v568
      %v570 = vpop.f32.mrf.mxu0
      %571 = vmatprep.mubr.f32.mxu0 0.0
      %572 = vmatmul.mubr.f32.gmra.mxu0 %v490
      %v573 = vpop.f32.mrf.mxu0
      %v574 = vadd.f32 0.0, %v573
      %v575 = vpop.f32.mrf.mxu0
      %576 = vmatprep.mubr.f32.mxu0 0.0
      %577 = vmatmul.mubr.f32.gmra.mxu0 %v492
      %v578 = vpop.f32.mrf.mxu0
      %v579 = vadd.f32 0.0, %v578
      %v580 = vpop.f32.mrf.mxu0
      %581 = vdwg.mxu0
      %v582 = vadd.f32 %v467, %v564
      %v583 = vadd.f32 %v468, %v569
      %v584 = vadd.f32 %v469, %v574
      %v585 = vadd.f32 %v470, %v579
      %vm586 = vcmask 1045504
      %v587 = vrot.slane %v354, 2
      %v588 = vrot.slane %v346, 2
      %v589 = vsel %vm586, %v587, %v588
      %v590 = vrot.slane %v356, 2
      %v591 = vsel %vm586, %v588, %v590
      %v592 = vrot.slane %v355, 2
      %v593 = vrot.slane %v349, 2
      %v594 = vsel %vm586, %v592, %v593
      %v595 = vrot.slane %v357, 2
      %v596 = vsel %vm586, %v593, %v595
      %s597 = scalar_lea.vmem %s1, 8
      %v598 = vld [vmem:[%s597] sm:$0x7]
      %v599 = vsel %vm367, %v589, 0
      %v601 = vsel %vm367, %v591, 0
      %v603 = vsel %vm367, %v594, 0
      %v605 = vsel %vm367, %v596, 0
      %v608 = vsel %vm378, %v598, 0
      %610 = vmatprep.subr.mxu0 0.0
      %611 = vmatpush1.msra.mxu0 0.0
      %612 = vmatprep.subr.mxu0 0.0
      %613 = vmatpush1.msra.mxu0 0.0
      %614 = vmatprep.subr.mxu0 0.0
      %615 = vmatpush1.msra.mxu0 0.0
      %616 = vmatprep.subr.mxu0 0.0
      %617 = vmatpush1.msra.mxu0 0.0
      %618 = vmatprep.subr.mxu0 0.0
      %619 = vmatpush1.msra.mxu0 0.0
      %620 = vmatprep.subr.mxu0 0.0
      %621 = vmatpush1.msra.mxu0 0.0
      %622 = vmatprep.subr.mxu0 0.0
      %623 = vmatpush1.msra.mxu0 0.0
      %624 = vmatprep.subr.mxu0 0.0
      %625 = vmatpush1.msra.mxu0 0.0
      %626 = vmatprep.subr.mxu0 0.0
      %627 = vmatpush1.msra.mxu0 0.0
      %628 = vmatprep.subr.mxu0 0.0
      %629 = vmatpush1.msra.mxu0 0.0
      %630 = vmatprep.subr.mxu0 0.0
      %631 = vmatpush1.msra.mxu0 0.0
      %632 = vmatprep.subr.mxu0 0.0
      %633 = vmatpush1.msra.mxu0 0.0
      %634 = vmatprep.subr.mxu0 0.0
      %635 = vmatpush1.msra.mxu0 0.0
      %636 = vmatprep.subr.mxu0 0.0
      %637 = vmatpush1.msra.mxu0 0.0
      %638 = vmatprep.subr.mxu0 0.0
      %639 = vmatpush1.msra.mxu0 0.0
      %640 = vmatprep.subr.mxu0 0.0
      %641 = vmatpush1.msra.mxu0 %v608
      %642 = vmatprep.subr.mxu0 0.0
      %643 = vmatpush2.msra.mxu0 0.0
      %644 = vmatprep.subr.mxu0 0.0
      %645 = vmatpush2.msra.mxu0 0.0
      %646 = vmatprep.subr.mxu0 0.0
      %647 = vmatpush2.msra.mxu0 0.0
      %648 = vmatprep.subr.mxu0 0.0
      %649 = vmatpush2.msra.mxu0 0.0
      %650 = vmatprep.subr.mxu0 0.0
      %651 = vmatpush2.msra.mxu0 0.0
      %652 = vmatprep.subr.mxu0 0.0
      %653 = vmatpush2.msra.mxu0 0.0
      %654 = vmatprep.subr.mxu0 0.0
      %655 = vmatpush2.msra.mxu0 0.0
      %656 = vmatprep.subr.mxu0 0.0
      %657 = vmatpush2.msra.mxu0 0.0
      %658 = vmatprep.subr.mxu0 0.0
      %659 = vmatpush2.msra.mxu0 0.0
      %660 = vmatprep.subr.mxu0 0.0
      %661 = vmatpush2.msra.mxu0 0.0
      %662 = vmatprep.subr.mxu0 0.0
      %663 = vmatpush2.msra.mxu0 0.0
      %664 = vmatprep.subr.mxu0 0.0
      %665 = vmatpush2.msra.mxu0 0.0
      %666 = vmatprep.subr.mxu0 0.0
      %667 = vmatpush2.msra.mxu0 0.0
      %668 = vmatprep.subr.mxu0 0.0
      %669 = vmatpush2.msra.mxu0 0.0
      %670 = vmatprep.subr.mxu0 0.0
      %671 = vmatpush2.msra.mxu0 0.0
      %672 = vmatprep.subr.mxu0 0.0
      %673 = vmatpush2.msra.mxu0 0.0
      %674 = vmatprep.mubr.f32.mxu0 0.0
      %675 = vmatmul.mubr.f32.gmra.mxu0 %v599
      %v676 = vpop.f32.mrf.mxu0
      %v677 = vadd.f32 0.0, %v676
      %v678 = vpop.f32.mrf.mxu0
      %679 = vmatprep.mubr.f32.mxu0 0.0
      %680 = vmatmul.mubr.f32.gmra.mxu0 %v601
      %v681 = vpop.f32.mrf.mxu0
      %v682 = vadd.f32 0.0, %v681
      %v683 = vpop.f32.mrf.mxu0
      %684 = vmatprep.mubr.f32.mxu0 0.0
      %685 = vmatmul.mubr.f32.gmra.mxu0 %v603
      %v686 = vpop.f32.mrf.mxu0
      %v687 = vadd.f32 0.0, %v686
      %v688 = vpop.f32.mrf.mxu0
      %689 = vmatprep.mubr.f32.mxu0 0.0
      %690 = vmatmul.mubr.f32.gmra.mxu0 %v605
      %v691 = vpop.f32.mrf.mxu0
      %v692 = vadd.f32 0.0, %v691
      %v693 = vpop.f32.mrf.mxu0
      %694 = vdwg.mxu0
      %v695 = vadd.f32 %v582, %v677
      %v696 = vadd.f32 %v583, %v682
      %v697 = vadd.f32 %v584, %v687
      %v698 = vadd.f32 %v585, %v692
      %vm699 = vcmask 1044480
      %v700 = vrot.slane %v354, 3
      %v701 = vrot.slane %v346, 3
      %v702 = vsel %vm699, %v700, %v701
      %v703 = vrot.slane %v356, 3
      %v704 = vsel %vm699, %v701, %v703
      %v705 = vrot.slane %v355, 3
      %v706 = vrot.slane %v349, 3
      %v707 = vsel %vm699, %v705, %v706
      %v708 = vrot.slane %v357, 3
      %v709 = vsel %vm699, %v706, %v708
      %s710 = scalar_lea.vmem %s1, 12
      %v711 = vld [vmem:[%s710] sm:$0x7]
      %v712 = vsel %vm367, %v702, 0
      %v714 = vsel %vm367, %v704, 0
      %v716 = vsel %vm367, %v707, 0
      %v718 = vsel %vm367, %v709, 0
      %v721 = vsel %vm378, %v711, 0
      %723 = vmatprep.subr.mxu0 0.0
      %724 = vmatpush1.msra.mxu0 0.0
      %725 = vmatprep.subr.mxu0 0.0
      %726 = vmatpush1.msra.mxu0 0.0
      %727 = vmatprep.subr.mxu0 0.0
      %728 = vmatpush1.msra.mxu0 0.0
      %729 = vmatprep.subr.mxu0 0.0
      %730 = vmatpush1.msra.mxu0 0.0
      %731 = vmatprep.subr.mxu0 0.0
      %732 = vmatpush1.msra.mxu0 0.0
      %733 = vmatprep.subr.mxu0 0.0
      %734 = vmatpush1.msra.mxu0 0.0
      %735 = vmatprep.subr.mxu0 0.0
      %736 = vmatpush1.msra.mxu0 0.0
      %737 = vmatprep.subr.mxu0 0.0
      %738 = vmatpush1.msra.mxu0 0.0
      %739 = vmatprep.subr.mxu0 0.0
      %740 = vmatpush1.msra.mxu0 0.0
      %741 = vmatprep.subr.mxu0 0.0
      %742 = vmatpush1.msra.mxu0 0.0
      %743 = vmatprep.subr.mxu0 0.0
      %744 = vmatpush1.msra.mxu0 0.0
      %745 = vmatprep.subr.mxu0 0.0
      %746 = vmatpush1.msra.mxu0 0.0
      %747 = vmatprep.subr.mxu0 0.0
      %748 = vmatpush1.msra.mxu0 0.0
      %749 = vmatprep.subr.mxu0 0.0
      %750 = vmatpush1.msra.mxu0 0.0
      %751 = vmatprep.subr.mxu0 0.0
      %752 = vmatpush1.msra.mxu0 0.0
      %753 = vmatprep.subr.mxu0 0.0
      %754 = vmatpush1.msra.mxu0 %v721
      %755 = vmatprep.subr.mxu0 0.0
      %756 = vmatpush2.msra.mxu0 0.0
      %757 = vmatprep.subr.mxu0 0.0
      %758 = vmatpush2.msra.mxu0 0.0
      %759 = vmatprep.subr.mxu0 0.0
      %760 = vmatpush2.msra.mxu0 0.0
      %761 = vmatprep.subr.mxu0 0.0
      %762 = vmatpush2.msra.mxu0 0.0
      %763 = vmatprep.subr.mxu0 0.0
      %764 = vmatpush2.msra.mxu0 0.0
      %765 = vmatprep.subr.mxu0 0.0
      %766 = vmatpush2.msra.mxu0 0.0
      %767 = vmatprep.subr.mxu0 0.0
      %768 = vmatpush2.msra.mxu0 0.0
      %769 = vmatprep.subr.mxu0 0.0
      %770 = vmatpush2.msra.mxu0 0.0
      %771 = vmatprep.subr.mxu0 0.0
      %772 = vmatpush2.msra.mxu0 0.0
      %773 = vmatprep.subr.mxu0 0.0
      %774 = vmatpush2.msra.mxu0 0.0
      %775 = vmatprep.subr.mxu0 0.0
      %776 = vmatpush2.msra.mxu0 0.0
      %777 = vmatprep.subr.mxu0 0.0
      %778 = vmatpush2.msra.mxu0 0.0
      %779 = vmatprep.subr.mxu0 0.0
      %780 = vmatpush2.msra.mxu0 0.0
      %781 = vmatprep.subr.mxu0 0.0
      %782 = vmatpush2.msra.mxu0 0.0
      %783 = vmatprep.subr.mxu0 0.0
      %784 = vmatpush2.msra.mxu0 0.0
      %785 = vmatprep.subr.mxu0 0.0
      %786 = vmatpush2.msra.mxu0 0.0
      %787 = vmatprep.mubr.f32.mxu0 0.0
      %788 = vmatmul.mubr.f32.gmra.mxu0 %v712
      %v789 = vpop.f32.mrf.mxu0
      %v790 = vadd.f32 0.0, %v789
      %v791 = vpop.f32.mrf.mxu0
      %792 = vmatprep.mubr.f32.mxu0 0.0
      %793 = vmatmul.mubr.f32.gmra.mxu0 %v714
      %v794 = vpop.f32.mrf.mxu0
      %v795 = vadd.f32 0.0, %v794
      %v796 = vpop.f32.mrf.mxu0
      %797 = vmatprep.mubr.f32.mxu0 0.0
      %798 = vmatmul.mubr.f32.gmra.mxu0 %v716
      %v799 = vpop.f32.mrf.mxu0
      %v800 = vadd.f32 0.0, %v799
      %v801 = vpop.f32.mrf.mxu0
      %802 = vmatprep.mubr.f32.mxu0 0.0
      %803 = vmatmul.mubr.f32.gmra.mxu0 %v718
      %v804 = vpop.f32.mrf.mxu0
      %v805 = vadd.f32 0.0, %v804
      %v806 = vpop.f32.mrf.mxu0
      %807 = vdwg.mxu0
      %v808 = vadd.f32 %v695, %v790
      %v809 = vadd.f32 %v696, %v795
      %v810 = vadd.f32 %v697, %v800
      %v811 = vadd.f32 %v698, %v805
      %vm812 = vcmask 1043456
      %v813 = vrot.slane %v354, 4
      %v814 = vrot.slane %v346, 4
      %v815 = vsel %vm812, %v813, %v814
      %v816 = vrot.slane %v356, 4
      %v817 = vsel %vm812, %v814, %v816
      %v818 = vrot.slane %v355, 4
      %v819 = vrot.slane %v349, 4
      %v820 = vsel %vm812, %v818, %v819
      %v821 = vrot.slane %v357, 4
      %v822 = vsel %vm812, %v819, %v821
      %s823 = scalar_lea.vmem %s1, 16
      %v824 = vld [vmem:[%s823] sm:$0x7]
      %v825 = vsel %vm367, %v815, 0
      %v827 = vsel %vm367, %v817, 0
      %v829 = vsel %vm367, %v820, 0
      %v831 = vsel %vm367, %v822, 0
      %v834 = vsel %vm378, %v824, 0
      %836 = vmatprep.subr.mxu0 0.0
      %837 = vmatpush1.msra.mxu0 0.0
      %838 = vmatprep.subr.mxu0 0.0
      %839 = vmatpush1.msra.mxu0 0.0
      %840 = vmatprep.subr.mxu0 0.0
      %841 = vmatpush1.msra.mxu0 0.0
      %842 = vmatprep.subr.mxu0 0.0
      %843 = vmatpush1.msra.mxu0 0.0
      %844 = vmatprep.subr.mxu0 0.0
      %845 = vmatpush1.msra.mxu0 0.0
      %846 = vmatprep.subr.mxu0 0.0
      %847 = vmatpush1.msra.mxu0 0.0
      %848 = vmatprep.subr.mxu0 0.0
      %849 = vmatpush1.msra.mxu0 0.0
      %850 = vmatprep.subr.mxu0 0.0
      %851 = vmatpush1.msra.mxu0 0.0
      %852 = vmatprep.subr.mxu0 0.0
      %853 = vmatpush1.msra.mxu0 0.0
      %854 = vmatprep.subr.mxu0 0.0
      %855 = vmatpush1.msra.mxu0 0.0
      %856 = vmatprep.subr.mxu0 0.0
      %857 = vmatpush1.msra.mxu0 0.0
      %858 = vmatprep.subr.mxu0 0.0
      %859 = vmatpush1.msra.mxu0 0.0
      %860 = vmatprep.subr.mxu0 0.0
      %861 = vmatpush1.msra.mxu0 0.0
      %862 = vmatprep.subr.mxu0 0.0
      %863 = vmatpush1.msra.mxu0 0.0
      %864 = vmatprep.subr.mxu0 0.0
      %865 = vmatpush1.msra.mxu0 0.0
      %866 = vmatprep.subr.mxu0 0.0
      %867 = vmatpush1.msra.mxu0 %v834
      %868 = vmatprep.subr.mxu0 0.0
      %869 = vmatpush2.msra.mxu0 0.0
      %870 = vmatprep.subr.mxu0 0.0
      %871 = vmatpush2.msra.mxu0 0.0
      %872 = vmatprep.subr.mxu0 0.0
      %873 = vmatpush2.msra.mxu0 0.0
      %874 = vmatprep.subr.mxu0 0.0
      %875 = vmatpush2.msra.mxu0 0.0
      %876 = vmatprep.subr.mxu0 0.0
      %877 = vmatpush2.msra.mxu0 0.0
      %878 = vmatprep.subr.mxu0 0.0
      %879 = vmatpush2.msra.mxu0 0.0
      %880 = vmatprep.subr.mxu0 0.0
      %881 = vmatpush2.msra.mxu0 0.0
      %882 = vmatprep.subr.mxu0 0.0
      %883 = vmatpush2.msra.mxu0 0.0
      %884 = vmatprep.subr.mxu0 0.0
      %885 = vmatpush2.msra.mxu0 0.0
      %886 = vmatprep.subr.mxu0 0.0
      %887 = vmatpush2.msra.mxu0 0.0
      %888 = vmatprep.subr.mxu0 0.0
      %889 = vmatpush2.msra.mxu0 0.0
      %890 = vmatprep.subr.mxu0 0.0
      %891 = vmatpush2.msra.mxu0 0.0
      %892 = vmatprep.subr.mxu0 0.0
      %893 = vmatpush2.msra.mxu0 0.0
      %894 = vmatprep.subr.mxu0 0.0
      %895 = vmatpush2.msra.mxu0 0.0
      %896 = vmatprep.subr.mxu0 0.0
      %897 = vmatpush2.msra.mxu0 0.0
      %898 = vmatprep.subr.mxu0 0.0
      %899 = vmatpush2.msra.mxu0 0.0
      %900 = vmatprep.mubr.f32.mxu0 0.0
      %901 = vmatmul.mubr.f32.gmra.mxu0 %v825
      %v902 = vpop.f32.mrf.mxu0
      %v903 = vadd.f32 0.0, %v902
      %v904 = vpop.f32.mrf.mxu0
      %905 = vmatprep.mubr.f32.mxu0 0.0
      %906 = vmatmul.mubr.f32.gmra.mxu0 %v827
      %v907 = vpop.f32.mrf.mxu0
      %v908 = vadd.f32 0.0, %v907
      %v909 = vpop.f32.mrf.mxu0
      %910 = vmatprep.mubr.f32.mxu0 0.0
      %911 = vmatmul.mubr.f32.gmra.mxu0 %v829
      %v912 = vpop.f32.mrf.mxu0
      %v913 = vadd.f32 0.0, %v912
      %v914 = vpop.f32.mrf.mxu0
      %915 = vmatprep.mubr.f32.mxu0 0.0
      %916 = vmatmul.mubr.f32.gmra.mxu0 %v831
      %v917 = vpop.f32.mrf.mxu0
      %v918 = vadd.f32 0.0, %v917
      %v919 = vpop.f32.mrf.mxu0
      %920 = vdwg.mxu0
      %v921 = vadd.f32 %v808, %v903
      %v922 = vadd.f32 %v809, %v908
      %v923 = vadd.f32 %v810, %v913
      %v924 = vadd.f32 %v811, %v918
      %vm925 = vcmp.gt.f32.partialorder %v921, 0.0
      %vm926 = vcmp.gt.f32.partialorder %v922, 0.0
      %vm927 = vcmp.gt.f32.partialorder %v923, 0.0
      %vm928 = vcmp.gt.f32.partialorder %v924, 0.0
      %v929 = vmul.f32 %v921, 1.442695
      %v930 = vpow.pop %v929
      %v931 = vmul.f32 %v922, 1.442695
      %v932 = vpow.pop %v931
      %v933 = vmul.f32 %v923, 1.442695
      %v934 = vpow.pop %v933
      %v935 = vmul.f32 %v924, 1.442695
      %v936 = vpow.pop %v935
      %v937 = vsub.f32 %v930, 1.0
      %v938 = vsub.f32 %v932, 1.0
      %v939 = vsub.f32 %v934, 1.0
      %v940 = vsub.f32 %v936, 1.0
      %v941 = vsel %vm925, %v921, %v937
      %v942 = vsel %vm926, %v922, %v938
      %v943 = vsel %vm927, %v923, %v939
      %v944 = vsel %vm928, %v924, %v940
      %945 = vst [vmem:[#allocation2] sm:$0x3] 0.0
      %946 = vst [vmem:[#allocation2 + $0x18] sm:$0x3] 0.0
      %947 = vst [vmem:[#allocation2 + $0x12] sm:$0x3] 0.0
      %948 = vst [vmem:[#allocation2 + $0x2a] sm:$0x3] 0.0
      %949 = vst [vmem:[#allocation2 + $0x2] sm:$0xff] %v941
      %950 = vst [vmem:[#allocation2 + $0xa] sm:$0xff] %v942
      %951 = vst [vmem:[#allocation2 + $0x1a] sm:$0xff] %v943
      %952 = vst [vmem:[#allocation2 + $0x22] sm:$0xff] %v944
      %v953 = vld [vmem:[%s4] sm:$0x1]
      %v955 = vlaneseq
      %v956 = vshrl.u32 %v955, 7
      %v957 = vsub.s32 0, %v956
      %v958 = vrot.slane %v953, %v957
      %v960 = vadd.f32 %v958, 0.0
      %v961 = vld [vmem:[#allocation2] sm:$0xff]
      %v962 = vld [vmem:[#allocation2 + $0x8] sm:$0xff]
      %v963 = vld [vmem:[#allocation2 + $0x18] sm:$0xff]
      %v964 = vld [vmem:[#allocation2 + $0x20] sm:$0xff]
      %v965 = vld [vmem:[%s3] sm:$0xff]
      %v966 = vld [vmem:[%s3 + $0x8] sm:$0xff]
      %v967 = vld [vmem:[%s3 + $0x10] sm:$0xff]
      %v968 = vld [vmem:[%s3 + $0x18] sm:$0xff]
      %v969 = vld [vmem:[%s3 + $0x20] sm:$0xff]
      %v970 = vld [vmem:[%s3 + $0x28] sm:$0xff]
      %v971 = vld [vmem:[%s3 + $0x30] sm:$0xff]
      %v972 = vld [vmem:[%s3 + $0x38] sm:$0xff]
      %v973 = vld [vmem:[%s3 + $0x40] sm:$0xff]
      %v974 = vld [vmem:[%s3 + $0x48] sm:$0xff]
      %v975 = vld [vmem:[%s3 + $0x50] sm:$0xff]
      %v976 = vld [vmem:[%s3 + $0x58] sm:$0xff]
      %v977 = vld [vmem:[%s3 + $0x60] sm:$0xff]
      %v978 = vld [vmem:[%s3 + $0x68] sm:$0xff]
      %v979 = vld [vmem:[%s3 + $0x70] sm:$0xff]
      %v980 = vld [vmem:[%s3 + $0x78] sm:$0xff]
      %981 = vmatprep.subr.mxu0 0.0
      %982 = vmatpush1.msra.mxu0 %v980
      %983 = vmatprep.subr.mxu0 0.0
      %984 = vmatpush1.msra.mxu0 %v979
      %985 = vmatprep.subr.mxu0 0.0
      %986 = vmatpush1.msra.mxu0 %v978
      %987 = vmatprep.subr.mxu0 0.0
      %988 = vmatpush1.msra.mxu0 %v977
      %989 = vmatprep.subr.mxu0 0.0
      %990 = vmatpush1.msra.mxu0 %v976
      %991 = vmatprep.subr.mxu0 0.0
      %992 = vmatpush1.msra.mxu0 %v975
      %993 = vmatprep.subr.mxu0 0.0
      %994 = vmatpush1.msra.mxu0 %v974
      %995 = vmatprep.subr.mxu0 0.0
      %996 = vmatpush1.msra.mxu0 %v973
      %997 = vmatprep.subr.mxu0 0.0
      %998 = vmatpush1.msra.mxu0 %v972
      %999 = vmatprep.subr.mxu0 0.0
      %1000 = vmatpush1.msra.mxu0 %v971
      %1001 = vmatprep.subr.mxu0 0.0
      %1002 = vmatpush1.msra.mxu0 %v970
      %1003 = vmatprep.subr.mxu0 0.0
      %1004 = vmatpush1.msra.mxu0 %v969
      %1005 = vmatprep.subr.mxu0 0.0
      %1006 = vmatpush1.msra.mxu0 %v968
      %1007 = vmatprep.subr.mxu0 0.0
      %1008 = vmatpush1.msra.mxu0 %v967
      %1009 = vmatprep.subr.mxu0 0.0
      %1010 = vmatpush1.msra.mxu0 %v966
      %1011 = vmatprep.subr.mxu0 0.0
      %1012 = vmatpush1.msra.mxu0 %v965
      %1013 = vmatprep.subr.mxu0 0.0
      %1014 = vmatpush2.msra.mxu0 0.0
      %1015 = vmatprep.subr.mxu0 0.0
      %1016 = vmatpush2.msra.mxu0 0.0
      %1017 = vmatprep.subr.mxu0 0.0
      %1018 = vmatpush2.msra.mxu0 0.0
      %1019 = vmatprep.subr.mxu0 0.0
      %1020 = vmatpush2.msra.mxu0 0.0
      %1021 = vmatprep.subr.mxu0 0.0
      %1022 = vmatpush2.msra.mxu0 0.0
      %1023 = vmatprep.subr.mxu0 0.0
      %1024 = vmatpush2.msra.mxu0 0.0
      %1025 = vmatprep.subr.mxu0 0.0
      %1026 = vmatpush2.msra.mxu0 0.0
      %1027 = vmatprep.subr.mxu0 0.0
      %1028 = vmatpush2.msra.mxu0 0.0
      %1029 = vmatprep.subr.mxu0 0.0
      %1030 = vmatpush2.msra.mxu0 0.0
      %1031 = vmatprep.subr.mxu0 0.0
      %1032 = vmatpush2.msra.mxu0 0.0
      %1033 = vmatprep.subr.mxu0 0.0
      %1034 = vmatpush2.msra.mxu0 0.0
      %1035 = vmatprep.subr.mxu0 0.0
      %1036 = vmatpush2.msra.mxu0 0.0
      %1037 = vmatprep.subr.mxu0 0.0
      %1038 = vmatpush2.msra.mxu0 0.0
      %1039 = vmatprep.subr.mxu0 0.0
      %1040 = vmatpush2.msra.mxu0 0.0
      %1041 = vmatprep.subr.mxu0 0.0
      %1042 = vmatpush2.msra.mxu0 0.0
      %1043 = vmatprep.subr.mxu0 0.0
      %1044 = vmatpush2.msra.mxu0 0.0
      %1045 = vmatprep.mubr.f32.mxu0 0.0
      %1046 = vmatmul.mubr.f32.gmra.mxu0 %v961
      %v1047 = vpop.f32.mrf.mxu0
      %v1048 = vadd.f32 0.0, %v1047
      %v1049 = vpop.f32.mrf.mxu0
      %1050 = vmatprep.mubr.f32.mxu0 0.0
      %1051 = vmatmul.mubr.f32.gmra.mxu0 %v962
      %v1052 = vpop.f32.mrf.mxu0
      %v1053 = vadd.f32 0.0, %v1052
      %v1054 = vpop.f32.mrf.mxu0
      %1055 = vmatprep.mubr.f32.mxu0 0.0
      %1056 = vmatmul.mubr.f32.gmra.mxu0 %v963
      %v1057 = vpop.f32.mrf.mxu0
      %v1058 = vadd.f32 0.0, %v1057
      %v1059 = vpop.f32.mrf.mxu0
      %1060 = vmatprep.mubr.f32.mxu0 0.0
      %1061 = vmatmul.mubr.f32.gmra.mxu0 %v964
      %v1062 = vpop.f32.mrf.mxu0
      %v1063 = vadd.f32 0.0, %v1062
      %v1064 = vpop.f32.mrf.mxu0
      %1065 = vdwg.mxu0
      %v1066 = vadd.f32 %v960, %v1048
      %v1067 = vadd.f32 %v960, %v1053
      %v1068 = vadd.f32 %v960, %v1058
      %v1069 = vadd.f32 %v960, %v1063
      %v1070 = vld [vmem:[#allocation2 + $0x1] sm:$0xff]
      %v1071 = vld [vmem:[#allocation2 + $0x9] sm:$0xff]
      %v1072 = vld [vmem:[#allocation2 + $0x19] sm:$0xff]
      %v1073 = vld [vmem:[#allocation2 + $0x21] sm:$0xff]
      %s1074 = scalar_lea.vmem %s3, 128
      %v1075 = vld [vmem:[%s1074] sm:$0xff]
      %v1076 = vld [vmem:[%s1074 + $0x8] sm:$0xff]
      %v1077 = vld [vmem:[%s1074 + $0x10] sm:$0xff]
      %v1078 = vld [vmem:[%s1074 + $0x18] sm:$0xff]
      %v1079 = vld [vmem:[%s1074 + $0x20] sm:$0xff]
      %v1080 = vld [vmem:[%s1074 + $0x28] sm:$0xff]
      %v1081 = vld [vmem:[%s1074 + $0x30] sm:$0xff]
      %v1082 = vld [vmem:[%s1074 + $0x38] sm:$0xff]
      %v1083 = vld [vmem:[%s1074 + $0x40] sm:$0xff]
      %v1084 = vld [vmem:[%s1074 + $0x48] sm:$0xff]
      %v1085 = vld [vmem:[%s1074 + $0x50] sm:$0xff]
      %v1086 = vld [vmem:[%s1074 + $0x58] sm:$0xff]
      %v1087 = vld [vmem:[%s1074 + $0x60] sm:$0xff]
      %v1088 = vld [vmem:[%s1074 + $0x68] sm:$0xff]
      %v1089 = vld [vmem:[%s1074 + $0x70] sm:$0xff]
      %v1090 = vld [vmem:[%s1074 + $0x78] sm:$0xff]
      %1091 = vmatprep.subr.mxu0 0.0
      %1092 = vmatpush1.msra.mxu0 %v1090
      %1093 = vmatprep.subr.mxu0 0.0
      %1094 = vmatpush1.msra.mxu0 %v1089
      %1095 = vmatprep.subr.mxu0 0.0
      %1096 = vmatpush1.msra.mxu0 %v1088
      %1097 = vmatprep.subr.mxu0 0.0
      %1098 = vmatpush1.msra.mxu0 %v1087
      %1099 = vmatprep.subr.mxu0 0.0
      %1100 = vmatpush1.msra.mxu0 %v1086
      %1101 = vmatprep.subr.mxu0 0.0
      %1102 = vmatpush1.msra.mxu0 %v1085
      %1103 = vmatprep.subr.mxu0 0.0
      %1104 = vmatpush1.msra.mxu0 %v1084
      %1105 = vmatprep.subr.mxu0 0.0
      %1106 = vmatpush1.msra.mxu0 %v1083
      %1107 = vmatprep.subr.mxu0 0.0
      %1108 = vmatpush1.msra.mxu0 %v1082
      %1109 = vmatprep.subr.mxu0 0.0
      %1110 = vmatpush1.msra.mxu0 %v1081
      %1111 = vmatprep.subr.mxu0 0.0
      %1112 = vmatpush1.msra.mxu0 %v1080
      %1113 = vmatprep.subr.mxu0 0.0
      %1114 = vmatpush1.msra.mxu0 %v1079
      %1115 = vmatprep.subr.mxu0 0.0
      %1116 = vmatpush1.msra.mxu0 %v1078
      %1117 = vmatprep.subr.mxu0 0.0
      %1118 = vmatpush1.msra.mxu0 %v1077
      %1119 = vmatprep.subr.mxu0 0.0
      %1120 = vmatpush1.msra.mxu0 %v1076
      %1121 = vmatprep.subr.mxu0 0.0
      %1122 = vmatpush1.msra.mxu0 %v1075
      %1123 = vmatprep.subr.mxu0 0.0
      %1124 = vmatpush2.msra.mxu0 0.0
      %1125 = vmatprep.subr.mxu0 0.0
      %1126 = vmatpush2.msra.mxu0 0.0
      %1127 = vmatprep.subr.mxu0 0.0
      %1128 = vmatpush2.msra.mxu0 0.0
      %1129 = vmatprep.subr.mxu0 0.0
      %1130 = vmatpush2.msra.mxu0 0.0
      %1131 = vmatprep.subr.mxu0 0.0
      %1132 = vmatpush2.msra.mxu0 0.0
      %1133 = vmatprep.subr.mxu0 0.0
      %1134 = vmatpush2.msra.mxu0 0.0
      %1135 = vmatprep.subr.mxu0 0.0
      %1136 = vmatpush2.msra.mxu0 0.0
      %1137 = vmatprep.subr.mxu0 0.0
      %1138 = vmatpush2.msra.mxu0 0.0
      %1139 = vmatprep.subr.mxu0 0.0
      %1140 = vmatpush2.msra.mxu0 0.0
      %1141 = vmatprep.subr.mxu0 0.0
      %1142 = vmatpush2.msra.mxu0 0.0
      %1143 = vmatprep.subr.mxu0 0.0
      %1144 = vmatpush2.msra.mxu0 0.0
      %1145 = vmatprep.subr.mxu0 0.0
      %1146 = vmatpush2.msra.mxu0 0.0
      %1147 = vmatprep.subr.mxu0 0.0
      %1148 = vmatpush2.msra.mxu0 0.0
      %1149 = vmatprep.subr.mxu0 0.0
      %1150 = vmatpush2.msra.mxu0 0.0
      %1151 = vmatprep.subr.mxu0 0.0
      %1152 = vmatpush2.msra.mxu0 0.0
      %1153 = vmatprep.subr.mxu0 0.0
      %1154 = vmatpush2.msra.mxu0 0.0
      %1155 = vmatprep.mubr.f32.mxu0 0.0
      %1156 = vmatmul.mubr.f32.gmra.mxu0 %v1070
      %v1157 = vpop.f32.mrf.mxu0
      %v1158 = vadd.f32 0.0, %v1157
      %v1159 = vpop.f32.mrf.mxu0
      %1160 = vmatprep.mubr.f32.mxu0 0.0
      %1161 = vmatmul.mubr.f32.gmra.mxu0 %v1071
      %v1162 = vpop.f32.mrf.mxu0
      %v1163 = vadd.f32 0.0, %v1162
      %v1164 = vpop.f32.mrf.mxu0
      %1165 = vmatprep.mubr.f32.mxu0 0.0
      %1166 = vmatmul.mubr.f32.gmra.mxu0 %v1072
      %v1167 = vpop.f32.mrf.mxu0
      %v1168 = vadd.f32 0.0, %v1167
      %v1169 = vpop.f32.mrf.mxu0
      %1170 = vmatprep.mubr.f32.mxu0 0.0
      %1171 = vmatmul.mubr.f32.gmra.mxu0 %v1073
      %v1172 = vpop.f32.mrf.mxu0
      %v1173 = vadd.f32 0.0, %v1172
      %v1174 = vpop.f32.mrf.mxu0
      %1175 = vdwg.mxu0
      %v1176 = vadd.f32 %v1066, %v1158
      %v1177 = vadd.f32 %v1067, %v1163
      %v1178 = vadd.f32 %v1068, %v1168
      %v1179 = vadd.f32 %v1069, %v1173
      %v1180 = vld [vmem:[#allocation2 + $0x2] sm:$0xff]
      %v1181 = vld [vmem:[#allocation2 + $0xa] sm:$0xff]
      %v1182 = vld [vmem:[#allocation2 + $0x1a] sm:$0xff]
      %v1183 = vld [vmem:[#allocation2 + $0x22] sm:$0xff]
      %s1184 = scalar_lea.vmem %s3, 256
      %v1185 = vld [vmem:[%s1184] sm:$0xff]
      %v1186 = vld [vmem:[%s1184 + $0x8] sm:$0xff]
      %v1187 = vld [vmem:[%s1184 + $0x10] sm:$0xff]
      %v1188 = vld [vmem:[%s1184 + $0x18] sm:$0xff]
      %v1189 = vld [vmem:[%s1184 + $0x20] sm:$0xff]
      %v1190 = vld [vmem:[%s1184 + $0x28] sm:$0xff]
      %v1191 = vld [vmem:[%s1184 + $0x30] sm:$0xff]
      %v1192 = vld [vmem:[%s1184 + $0x38] sm:$0xff]
      %v1193 = vld [vmem:[%s1184 + $0x40] sm:$0xff]
      %v1194 = vld [vmem:[%s1184 + $0x48] sm:$0xff]
      %v1195 = vld [vmem:[%s1184 + $0x50] sm:$0xff]
      %v1196 = vld [vmem:[%s1184 + $0x58] sm:$0xff]
      %v1197 = vld [vmem:[%s1184 + $0x60] sm:$0xff]
      %v1198 = vld [vmem:[%s1184 + $0x68] sm:$0xff]
      %v1199 = vld [vmem:[%s1184 + $0x70] sm:$0xff]
      %v1200 = vld [vmem:[%s1184 + $0x78] sm:$0xff]
      %1201 = vmatprep.subr.mxu0 0.0
      %1202 = vmatpush1.msra.mxu0 %v1200
      %1203 = vmatprep.subr.mxu0 0.0
      %1204 = vmatpush1.msra.mxu0 %v1199
      %1205 = vmatprep.subr.mxu0 0.0
      %1206 = vmatpush1.msra.mxu0 %v1198
      %1207 = vmatprep.subr.mxu0 0.0
      %1208 = vmatpush1.msra.mxu0 %v1197
      %1209 = vmatprep.subr.mxu0 0.0
      %1210 = vmatpush1.msra.mxu0 %v1196
      %1211 = vmatprep.subr.mxu0 0.0
      %1212 = vmatpush1.msra.mxu0 %v1195
      %1213 = vmatprep.subr.mxu0 0.0
      %1214 = vmatpush1.msra.mxu0 %v1194
      %1215 = vmatprep.subr.mxu0 0.0
      %1216 = vmatpush1.msra.mxu0 %v1193
      %1217 = vmatprep.subr.mxu0 0.0
      %1218 = vmatpush1.msra.mxu0 %v1192
      %1219 = vmatprep.subr.mxu0 0.0
      %1220 = vmatpush1.msra.mxu0 %v1191
      %1221 = vmatprep.subr.mxu0 0.0
      %1222 = vmatpush1.msra.mxu0 %v1190
      %1223 = vmatprep.subr.mxu0 0.0
      %1224 = vmatpush1.msra.mxu0 %v1189
      %1225 = vmatprep.subr.mxu0 0.0
      %1226 = vmatpush1.msra.mxu0 %v1188
      %1227 = vmatprep.subr.mxu0 0.0
      %1228 = vmatpush1.msra.mxu0 %v1187
      %1229 = vmatprep.subr.mxu0 0.0
      %1230 = vmatpush1.msra.mxu0 %v1186
      %1231 = vmatprep.subr.mxu0 0.0
      %1232 = vmatpush1.msra.mxu0 %v1185
      %1233 = vmatprep.subr.mxu0 0.0
      %1234 = vmatpush2.msra.mxu0 0.0
      %1235 = vmatprep.subr.mxu0 0.0
      %1236 = vmatpush2.msra.mxu0 0.0
      %1237 = vmatprep.subr.mxu0 0.0
      %1238 = vmatpush2.msra.mxu0 0.0
      %1239 = vmatprep.subr.mxu0 0.0
      %1240 = vmatpush2.msra.mxu0 0.0
      %1241 = vmatprep.subr.mxu0 0.0
      %1242 = vmatpush2.msra.mxu0 0.0
      %1243 = vmatprep.subr.mxu0 0.0
      %1244 = vmatpush2.msra.mxu0 0.0
      %1245 = vmatprep.subr.mxu0 0.0
      %1246 = vmatpush2.msra.mxu0 0.0
      %1247 = vmatprep.subr.mxu0 0.0
      %1248 = vmatpush2.msra.mxu0 0.0
      %1249 = vmatprep.subr.mxu0 0.0
      %1250 = vmatpush2.msra.mxu0 0.0
      %1251 = vmatprep.subr.mxu0 0.0
      %1252 = vmatpush2.msra.mxu0 0.0
      %1253 = vmatprep.subr.mxu0 0.0
      %1254 = vmatpush2.msra.mxu0 0.0
      %1255 = vmatprep.subr.mxu0 0.0
      %1256 = vmatpush2.msra.mxu0 0.0
      %1257 = vmatprep.subr.mxu0 0.0
      %1258 = vmatpush2.msra.mxu0 0.0
      %1259 = vmatprep.subr.mxu0 0.0
      %1260 = vmatpush2.msra.mxu0 0.0
      %1261 = vmatprep.subr.mxu0 0.0
      %1262 = vmatpush2.msra.mxu0 0.0
      %1263 = vmatprep.subr.mxu0 0.0
      %1264 = vmatpush2.msra.mxu0 0.0
      %1265 = vmatprep.mubr.f32.mxu0 0.0
      %1266 = vmatmul.mubr.f32.gmra.mxu0 %v1180
      %v1267 = vpop.f32.mrf.mxu0
      %v1268 = vadd.f32 0.0, %v1267
      %v1269 = vpop.f32.mrf.mxu0
      %1270 = vmatprep.mubr.f32.mxu0 0.0
      %1271 = vmatmul.mubr.f32.gmra.mxu0 %v1181
      %v1272 = vpop.f32.mrf.mxu0
      %v1273 = vadd.f32 0.0, %v1272
      %v1274 = vpop.f32.mrf.mxu0
      %1275 = vmatprep.mubr.f32.mxu0 0.0
      %1276 = vmatmul.mubr.f32.gmra.mxu0 %v1182
      %v1277 = vpop.f32.mrf.mxu0
      %v1278 = vadd.f32 0.0, %v1277
      %v1279 = vpop.f32.mrf.mxu0
      %1280 = vmatprep.mubr.f32.mxu0 0.0
      %1281 = vmatmul.mubr.f32.gmra.mxu0 %v1183
      %v1282 = vpop.f32.mrf.mxu0
      %v1283 = vadd.f32 0.0, %v1282
      %v1284 = vpop.f32.mrf.mxu0
      %1285 = vdwg.mxu0
      %v1286 = vadd.f32 %v1176, %v1268
      %v1287 = vadd.f32 %v1177, %v1273
      %v1288 = vadd.f32 %v1178, %v1278
      %v1289 = vadd.f32 %v1179, %v1283
      %v1290 = vld [vmem:[#allocation2 + $0x3] sm:$0xff]
      %v1291 = vld [vmem:[#allocation2 + $0xb] sm:$0xff]
      %v1292 = vld [vmem:[#allocation2 + $0x1b] sm:$0xff]
      %v1293 = vld [vmem:[#allocation2 + $0x23] sm:$0xff]
      %s1294 = scalar_lea.vmem %s3, 384
      %v1295 = vld [vmem:[%s1294] sm:$0xff]
      %v1296 = vld [vmem:[%s1294 + $0x8] sm:$0xff]
      %v1297 = vld [vmem:[%s1294 + $0x10] sm:$0xff]
      %v1298 = vld [vmem:[%s1294 + $0x18] sm:$0xff]
      %v1299 = vld [vmem:[%s1294 + $0x20] sm:$0xff]
      %v1300 = vld [vmem:[%s1294 + $0x28] sm:$0xff]
      %v1301 = vld [vmem:[%s1294 + $0x30] sm:$0xff]
      %v1302 = vld [vmem:[%s1294 + $0x38] sm:$0xff]
      %v1303 = vld [vmem:[%s1294 + $0x40] sm:$0xff]
      %v1304 = vld [vmem:[%s1294 + $0x48] sm:$0xff]
      %v1305 = vld [vmem:[%s1294 + $0x50] sm:$0xff]
      %v1306 = vld [vmem:[%s1294 + $0x58] sm:$0xff]
      %v1307 = vld [vmem:[%s1294 + $0x60] sm:$0xff]
      %v1308 = vld [vmem:[%s1294 + $0x68] sm:$0xff]
      %v1309 = vld [vmem:[%s1294 + $0x70] sm:$0xff]
      %v1310 = vld [vmem:[%s1294 + $0x78] sm:$0xff]
      %1311 = vmatprep.subr.mxu0 0.0
      %1312 = vmatpush1.msra.mxu0 %v1310
      %1313 = vmatprep.subr.mxu0 0.0
      %1314 = vmatpush1.msra.mxu0 %v1309
      %1315 = vmatprep.subr.mxu0 0.0
      %1316 = vmatpush1.msra.mxu0 %v1308
      %1317 = vmatprep.subr.mxu0 0.0
      %1318 = vmatpush1.msra.mxu0 %v1307
      %1319 = vmatprep.subr.mxu0 0.0
      %1320 = vmatpush1.msra.mxu0 %v1306
      %1321 = vmatprep.subr.mxu0 0.0
      %1322 = vmatpush1.msra.mxu0 %v1305
      %1323 = vmatprep.subr.mxu0 0.0
      %1324 = vmatpush1.msra.mxu0 %v1304
      %1325 = vmatprep.subr.mxu0 0.0
      %1326 = vmatpush1.msra.mxu0 %v1303
      %1327 = vmatprep.subr.mxu0 0.0
      %1328 = vmatpush1.msra.mxu0 %v1302
      %1329 = vmatprep.subr.mxu0 0.0
      %1330 = vmatpush1.msra.mxu0 %v1301
      %1331 = vmatprep.subr.mxu0 0.0
      %1332 = vmatpush1.msra.mxu0 %v1300
      %1333 = vmatprep.subr.mxu0 0.0
      %1334 = vmatpush1.msra.mxu0 %v1299
      %1335 = vmatprep.subr.mxu0 0.0
      %1336 = vmatpush1.msra.mxu0 %v1298
      %1337 = vmatprep.subr.mxu0 0.0
      %1338 = vmatpush1.msra.mxu0 %v1297
      %1339 = vmatprep.subr.mxu0 0.0
      %1340 = vmatpush1.msra.mxu0 %v1296
      %1341 = vmatprep.subr.mxu0 0.0
      %1342 = vmatpush1.msra.mxu0 %v1295
      %1343 = vmatprep.subr.mxu0 0.0
      %1344 = vmatpush2.msra.mxu0 0.0
      %1345 = vmatprep.subr.mxu0 0.0
      %1346 = vmatpush2.msra.mxu0 0.0
      %1347 = vmatprep.subr.mxu0 0.0
      %1348 = vmatpush2.msra.mxu0 0.0
      %1349 = vmatprep.subr.mxu0 0.0
      %1350 = vmatpush2.msra.mxu0 0.0
      %1351 = vmatprep.subr.mxu0 0.0
      %1352 = vmatpush2.msra.mxu0 0.0
      %1353 = vmatprep.subr.mxu0 0.0
      %1354 = vmatpush2.msra.mxu0 0.0
      %1355 = vmatprep.subr.mxu0 0.0
      %1356 = vmatpush2.msra.mxu0 0.0
      %1357 = vmatprep.subr.mxu0 0.0
      %1358 = vmatpush2.msra.mxu0 0.0
      %1359 = vmatprep.subr.mxu0 0.0
      %1360 = vmatpush2.msra.mxu0 0.0
      %1361 = vmatprep.subr.mxu0 0.0
      %1362 = vmatpush2.msra.mxu0 0.0
      %1363 = vmatprep.subr.mxu0 0.0
      %1364 = vmatpush2.msra.mxu0 0.0
      %1365 = vmatprep.subr.mxu0 0.0
      %1366 = vmatpush2.msra.mxu0 0.0
      %1367 = vmatprep.subr.mxu0 0.0
      %1368 = vmatpush2.msra.mxu0 0.0
      %1369 = vmatprep.subr.mxu0 0.0
      %1370 = vmatpush2.msra.mxu0 0.0
      %1371 = vmatprep.subr.mxu0 0.0
      %1372 = vmatpush2.msra.mxu0 0.0
      %1373 = vmatprep.subr.mxu0 0.0
      %1374 = vmatpush2.msra.mxu0 0.0
      %1375 = vmatprep.mubr.f32.mxu0 0.0
      %1376 = vmatmul.mubr.f32.gmra.mxu0 %v1290
      %v1377 = vpop.f32.mrf.mxu0
      %v1378 = vadd.f32 0.0, %v1377
      %v1379 = vpop.f32.mrf.mxu0
      %1380 = vmatprep.mubr.f32.mxu0 0.0
      %1381 = vmatmul.mubr.f32.gmra.mxu0 %v1291
      %v1382 = vpop.f32.mrf.mxu0
      %v1383 = vadd.f32 0.0, %v1382
      %v1384 = vpop.f32.mrf.mxu0
      %1385 = vmatprep.mubr.f32.mxu0 0.0
      %1386 = vmatmul.mubr.f32.gmra.mxu0 %v1292
      %v1387 = vpop.f32.mrf.mxu0
      %v1388 = vadd.f32 0.0, %v1387
      %v1389 = vpop.f32.mrf.mxu0
      %1390 = vmatprep.mubr.f32.mxu0 0.0
      %1391 = vmatmul.mubr.f32.gmra.mxu0 %v1293
      %v1392 = vpop.f32.mrf.mxu0
      %v1393 = vadd.f32 0.0, %v1392
      %v1394 = vpop.f32.mrf.mxu0
      %1395 = vdwg.mxu0
      %v1396 = vadd.f32 %v1286, %v1378
      %v1397 = vadd.f32 %v1287, %v1383
      %v1398 = vadd.f32 %v1288, %v1388
      %v1399 = vadd.f32 %v1289, %v1393
      %v1400 = vld [vmem:[#allocation2 + $0x4] sm:$0xff]
      %v1401 = vld [vmem:[#allocation2 + $0xc] sm:$0xff]
      %v1402 = vld [vmem:[#allocation2 + $0x1c] sm:$0xff]
      %v1403 = vld [vmem:[#allocation2 + $0x24] sm:$0xff]
      %s1404 = scalar_lea.vmem %s3, 512
      %v1405 = vld [vmem:[%s1404] sm:$0xff]
      %v1406 = vld [vmem:[%s1404 + $0x8] sm:$0xff]
      %v1407 = vld [vmem:[%s1404 + $0x10] sm:$0xff]
      %v1408 = vld [vmem:[%s1404 + $0x18] sm:$0xff]
      %v1409 = vld [vmem:[%s1404 + $0x20] sm:$0xff]
      %v1410 = vld [vmem:[%s1404 + $0x28] sm:$0xff]
      %v1411 = vld [vmem:[%s1404 + $0x30] sm:$0xff]
      %v1412 = vld [vmem:[%s1404 + $0x38] sm:$0xff]
      %v1413 = vld [vmem:[%s1404 + $0x40] sm:$0xff]
      %v1414 = vld [vmem:[%s1404 + $0x48] sm:$0xff]
      %v1415 = vld [vmem:[%s1404 + $0x50] sm:$0xff]
      %v1416 = vld [vmem:[%s1404 + $0x58] sm:$0xff]
      %v1417 = vld [vmem:[%s1404 + $0x60] sm:$0xff]
      %v1418 = vld [vmem:[%s1404 + $0x68] sm:$0xff]
      %v1419 = vld [vmem:[%s1404 + $0x70] sm:$0xff]
      %v1420 = vld [vmem:[%s1404 + $0x78] sm:$0xff]
      %1421 = vmatprep.subr.mxu0 0.0
      %1422 = vmatpush1.msra.mxu0 %v1420
      %1423 = vmatprep.subr.mxu0 0.0
      %1424 = vmatpush1.msra.mxu0 %v1419
      %1425 = vmatprep.subr.mxu0 0.0
      %1426 = vmatpush1.msra.mxu0 %v1418
      %1427 = vmatprep.subr.mxu0 0.0
      %1428 = vmatpush1.msra.mxu0 %v1417
      %1429 = vmatprep.subr.mxu0 0.0
      %1430 = vmatpush1.msra.mxu0 %v1416
      %1431 = vmatprep.subr.mxu0 0.0
      %1432 = vmatpush1.msra.mxu0 %v1415
      %1433 = vmatprep.subr.mxu0 0.0
      %1434 = vmatpush1.msra.mxu0 %v1414
      %1435 = vmatprep.subr.mxu0 0.0
      %1436 = vmatpush1.msra.mxu0 %v1413
      %1437 = vmatprep.subr.mxu0 0.0
      %1438 = vmatpush1.msra.mxu0 %v1412
      %1439 = vmatprep.subr.mxu0 0.0
      %1440 = vmatpush1.msra.mxu0 %v1411
      %1441 = vmatprep.subr.mxu0 0.0
      %1442 = vmatpush1.msra.mxu0 %v1410
      %1443 = vmatprep.subr.mxu0 0.0
      %1444 = vmatpush1.msra.mxu0 %v1409
      %1445 = vmatprep.subr.mxu0 0.0
      %1446 = vmatpush1.msra.mxu0 %v1408
      %1447 = vmatprep.subr.mxu0 0.0
      %1448 = vmatpush1.msra.mxu0 %v1407
      %1449 = vmatprep.subr.mxu0 0.0
      %1450 = vmatpush1.msra.mxu0 %v1406
      %1451 = vmatprep.subr.mxu0 0.0
      %1452 = vmatpush1.msra.mxu0 %v1405
      %1453 = vmatprep.subr.mxu0 0.0
      %1454 = vmatpush2.msra.mxu0 0.0
      %1455 = vmatprep.subr.mxu0 0.0
      %1456 = vmatpush2.msra.mxu0 0.0
      %1457 = vmatprep.subr.mxu0 0.0
      %1458 = vmatpush2.msra.mxu0 0.0
      %1459 = vmatprep.subr.mxu0 0.0
      %1460 = vmatpush2.msra.mxu0 0.0
      %1461 = vmatprep.subr.mxu0 0.0
      %1462 = vmatpush2.msra.mxu0 0.0
      %1463 = vmatprep.subr.mxu0 0.0
      %1464 = vmatpush2.msra.mxu0 0.0
      %1465 = vmatprep.subr.mxu0 0.0
      %1466 = vmatpush2.msra.mxu0 0.0
      %1467 = vmatprep.subr.mxu0 0.0
      %1468 = vmatpush2.msra.mxu0 0.0
      %1469 = vmatprep.subr.mxu0 0.0
      %1470 = vmatpush2.msra.mxu0 0.0
      %1471 = vmatprep.subr.mxu0 0.0
      %1472 = vmatpush2.msra.mxu0 0.0
      %1473 = vmatprep.subr.mxu0 0.0
      %1474 = vmatpush2.msra.mxu0 0.0
      %1475 = vmatprep.subr.mxu0 0.0
      %1476 = vmatpush2.msra.mxu0 0.0
      %1477 = vmatprep.subr.mxu0 0.0
      %1478 = vmatpush2.msra.mxu0 0.0
      %1479 = vmatprep.subr.mxu0 0.0
      %1480 = vmatpush2.msra.mxu0 0.0
      %1481 = vmatprep.subr.mxu0 0.0
      %1482 = vmatpush2.msra.mxu0 0.0
      %1483 = vmatprep.subr.mxu0 0.0
      %1484 = vmatpush2.msra.mxu0 0.0
      %1485 = vmatprep.mubr.f32.mxu0 0.0
      %1486 = vmatmul.mubr.f32.gmra.mxu0 %v1400
      %v1487 = vpop.f32.mrf.mxu0
      %v1488 = vadd.f32 0.0, %v1487
      %v1489 = vpop.f32.mrf.mxu0
      %1490 = vmatprep.mubr.f32.mxu0 0.0
      %1491 = vmatmul.mubr.f32.gmra.mxu0 %v1401
      %v1492 = vpop.f32.mrf.mxu0
      %v1493 = vadd.f32 0.0, %v1492
      %v1494 = vpop.f32.mrf.mxu0
      %1495 = vmatprep.mubr.f32.mxu0 0.0
      %1496 = vmatmul.mubr.f32.gmra.mxu0 %v1402
      %v1497 = vpop.f32.mrf.mxu0
      %v1498 = vadd.f32 0.0, %v1497
      %v1499 = vpop.f32.mrf.mxu0
      %1500 = vmatprep.mubr.f32.mxu0 0.0
      %1501 = vmatmul.mubr.f32.gmra.mxu0 %v1403
      %v1502 = vpop.f32.mrf.mxu0
      %v1503 = vadd.f32 0.0, %v1502
      %v1504 = vpop.f32.mrf.mxu0
      %1505 = vdwg.mxu0
      %v1506 = vadd.f32 %v1396, %v1488
      %v1507 = vadd.f32 %v1397, %v1493
      %v1508 = vadd.f32 %v1398, %v1498
      %v1509 = vadd.f32 %v1399, %v1503
      %vm1510 = vcmp.gt.f32.partialorder %v1506, 0.0
      %vm1511 = vcmp.gt.f32.partialorder %v1507, 0.0
      %vm1512 = vcmp.gt.f32.partialorder %v1508, 0.0
      %vm1513 = vcmp.gt.f32.partialorder %v1509, 0.0
      %v1514 = vmul.f32 %v1506, 1.442695
      %v1515 = vpow.pop %v1514
      %v1516 = vmul.f32 %v1507, 1.442695
      %v1517 = vpow.pop %v1516
      %v1518 = vmul.f32 %v1508, 1.442695
      %v1519 = vpow.pop %v1518
      %v1520 = vmul.f32 %v1509, 1.442695
      %v1521 = vpow.pop %v1520
      %v1522 = vsub.f32 %v1515, 1.0
      %v1523 = vsub.f32 %v1517, 1.0
      %v1524 = vsub.f32 %v1519, 1.0
      %v1525 = vsub.f32 %v1521, 1.0
      %v1526 = vsel %vm1510, %v1506, %v1522
      %v1527 = vsel %vm1511, %v1507, %v1523
      %v1528 = vsel %vm1512, %v1508, %v1524
      %v1529 = vsel %vm1513, %v1509, %v1525
      %v1530 = vld [vmem:[%s5] sm:$0xff]
      %v1531 = vld [vmem:[%s5 + $0x8] sm:$0xff]
      %v1532 = vld [vmem:[%s5 + $0x10] sm:$0xff]
      %v1533 = vld [vmem:[%s5 + $0x18] sm:$0xff]
      %v1534 = vld [vmem:[%s5 + $0x20] sm:$0xff]
      %v1535 = vld [vmem:[%s5 + $0x28] sm:$0xff]
      %v1536 = vld [vmem:[%s5 + $0x30] sm:$0xff]
      %v1537 = vld [vmem:[%s5 + $0x38] sm:$0xff]
      %v1538 = vld [vmem:[%s5 + $0x40] sm:$0xff]
      %v1539 = vld [vmem:[%s5 + $0x48] sm:$0xff]
      %v1540 = vld [vmem:[%s5 + $0x50] sm:$0xff]
      %v1541 = vld [vmem:[%s5 + $0x58] sm:$0xff]
      %v1542 = vld [vmem:[%s5 + $0x60] sm:$0xff]
      %v1543 = vld [vmem:[%s5 + $0x68] sm:$0xff]
      %v1544 = vld [vmem:[%s5 + $0x70] sm:$0xff]
      %v1545 = vld [vmem:[%s5 + $0x78] sm:$0xff]
      %v1546 = vld [vmem:[%s6] sm:$0x1]
      %v1548 = vlaneseq
      %v1549 = vshrl.u32 %v1548, 7
      %v1550 = vsub.s32 0, %v1549
      %v1551 = vrot.slane %v1546, %v1550
      %1553 = vmatprep.subr.mxu0 0.0
      %1554 = vmatpush1.msra.mxu0 %v1545
      %1555 = vmatprep.subr.mxu0 0.0
      %1556 = vmatpush1.msra.mxu0 %v1544
      %1557 = vmatprep.subr.mxu0 0.0
      %1558 = vmatpush1.msra.mxu0 %v1543
      %1559 = vmatprep.subr.mxu0 0.0
      %1560 = vmatpush1.msra.mxu0 %v1542
      %1561 = vmatprep.subr.mxu0 0.0
      %1562 = vmatpush1.msra.mxu0 %v1541
      %1563 = vmatprep.subr.mxu0 0.0
      %1564 = vmatpush1.msra.mxu0 %v1540
      %1565 = vmatprep.subr.mxu0 0.0
      %1566 = vmatpush1.msra.mxu0 %v1539
      %1567 = vmatprep.subr.mxu0 0.0
      %1568 = vmatpush1.msra.mxu0 %v1538
      %1569 = vmatprep.subr.mxu0 0.0
      %1570 = vmatpush1.msra.mxu0 %v1537
      %1571 = vmatprep.subr.mxu0 0.0
      %1572 = vmatpush1.msra.mxu0 %v1536
      %1573 = vmatprep.subr.mxu0 0.0
      %1574 = vmatpush1.msra.mxu0 %v1535
      %1575 = vmatprep.subr.mxu0 0.0
      %1576 = vmatpush1.msra.mxu0 %v1534
      %1577 = vmatprep.subr.mxu0 0.0
      %1578 = vmatpush1.msra.mxu0 %v1533
      %1579 = vmatprep.subr.mxu0 0.0
      %1580 = vmatpush1.msra.mxu0 %v1532
      %1581 = vmatprep.subr.mxu0 0.0
      %1582 = vmatpush1.msra.mxu0 %v1531
      %1583 = vmatprep.subr.mxu0 0.0
      %1584 = vmatpush1.msra.mxu0 %v1530
      %1585 = vmatprep.subr.mxu0 0.0
      %1586 = vmatpush2.msra.mxu0 0.0
      %1587 = vmatprep.subr.mxu0 0.0
      %1588 = vmatpush2.msra.mxu0 0.0
      %1589 = vmatprep.subr.mxu0 0.0
      %1590 = vmatpush2.msra.mxu0 0.0
      %1591 = vmatprep.subr.mxu0 0.0
      %1592 = vmatpush2.msra.mxu0 0.0
      %1593 = vmatprep.subr.mxu0 0.0
      %1594 = vmatpush2.msra.mxu0 0.0
      %1595 = vmatprep.subr.mxu0 0.0
      %1596 = vmatpush2.msra.mxu0 0.0
      %1597 = vmatprep.subr.mxu0 0.0
      %1598 = vmatpush2.msra.mxu0 0.0
      %1599 = vmatprep.subr.mxu0 0.0
      %1600 = vmatpush2.msra.mxu0 0.0
      %1601 = vmatprep.subr.mxu0 0.0
      %1602 = vmatpush2.msra.mxu0 0.0
      %1603 = vmatprep.subr.mxu0 0.0
      %1604 = vmatpush2.msra.mxu0 0.0
      %1605 = vmatprep.subr.mxu0 0.0
      %1606 = vmatpush2.msra.mxu0 0.0
      %1607 = vmatprep.subr.mxu0 0.0
      %1608 = vmatpush2.msra.mxu0 0.0
      %1609 = vmatprep.subr.mxu0 0.0
      %1610 = vmatpush2.msra.mxu0 0.0
      %1611 = vmatprep.subr.mxu0 0.0
      %1612 = vmatpush2.msra.mxu0 0.0
      %1613 = vmatprep.subr.mxu0 0.0
      %1614 = vmatpush2.msra.mxu0 0.0
      %1615 = vmatprep.subr.mxu0 0.0
      %1616 = vmatpush2.msra.mxu0 0.0
      %1617 = vmatprep.mubr.f32.mxu0 0.0
      %1618 = vmatmul.mubr.f32.gmra.mxu0 %v1526
      %v1619 = vpop.f32.mrf.mxu0
      %v1620 = vadd.f32 %v1551, %v1619
      %v1621 = vpop.f32.mrf.mxu0
      %1622 = vmatprep.mubr.f32.mxu0 0.0
      %1623 = vmatmul.mubr.f32.gmra.mxu0 %v1527
      %v1624 = vpop.f32.mrf.mxu0
      %v1625 = vadd.f32 %v1551, %v1624
      %v1626 = vpop.f32.mrf.mxu0
      %1627 = vmatprep.mubr.f32.mxu0 0.0
      %1628 = vmatmul.mubr.f32.gmra.mxu0 %v1528
      %v1629 = vpop.f32.mrf.mxu0
      %v1630 = vadd.f32 %v1551, %v1629
      %v1631 = vpop.f32.mrf.mxu0
      %1632 = vmatprep.mubr.f32.mxu0 0.0
      %1633 = vmatmul.mubr.f32.gmra.mxu0 %v1529
      %v1634 = vpop.f32.mrf.mxu0
      %v1635 = vadd.f32 %v1551, %v1634
      %v1636 = vpop.f32.mrf.mxu0
      %1637 = vdwg.mxu0
      %vm1638 = vcmp.gt.f32.partialorder %v1620, 0.0
      %vm1639 = vcmp.gt.f32.partialorder %v1625, 0.0
      %vm1640 = vcmp.gt.f32.partialorder %v1630, 0.0
      %vm1641 = vcmp.gt.f32.partialorder %v1635, 0.0
      %v1642 = vmul.f32 %v1620, 1.442695
      %v1643 = vpow.pop %v1642
      %v1644 = vmul.f32 %v1625, 1.442695
      %v1645 = vpow.pop %v1644
      %v1646 = vmul.f32 %v1630, 1.442695
      %v1647 = vpow.pop %v1646
      %v1648 = vmul.f32 %v1635, 1.442695
      %v1649 = vpow.pop %v1648
      %v1650 = vsub.f32 %v1643, 1.0
      %v1651 = vsub.f32 %v1645, 1.0
      %v1652 = vsub.f32 %v1647, 1.0
      %v1653 = vsub.f32 %v1649, 1.0
      %v1654 = vsel %vm1638, %v1620, %v1650
      %v1655 = vsel %vm1639, %v1625, %v1651
      %v1656 = vsel %vm1640, %v1630, %v1652
      %v1657 = vsel %vm1641, %v1635, %v1653
      %1658 = vst.msk [vmem:[%s320] sm:$0xff] %vm367, %v1654
      %1659 = vst.msk [vmem:[%s320 + $0x8] sm:$0xff] %vm367, %v1655
      %1660 = vst.msk [vmem:[%s320 + $0x10] sm:$0xff] %vm367, %v1656
      %1661 = vst.msk [vmem:[%s320 + $0x18] sm:$0xff] %vm367, %v1657
      %v1662 = vsel %vm367, %v1654, 0.0
      %v1663 = vsel %vm367, %v1655, 0.0
      %v1664 = vadd.f32 %v1662, %v1663
      %v1665 = vsel %vm367, %v1656, 0.0
      %v1666 = vadd.f32 %v1664, %v1665
      %v1667 = vsel %vm367, %v1657, 0.0
      %v1668 = vadd.f32 %v1666, %v1667
      %1669 = vadd.xlane.f32.xlu0 %v1668
      %v1670 = vpop.xlane.xlu0 %1669
      %v1671 = vrot.slane %v1670, 4
      %v1672 = vadd.f32 %v1670, %v1671
      %v1673 = vrot.slane %v1672, 2
      %v1674 = vadd.f32 %v1672, %v1673
      %v1675 = vrot.slane %v1674, 1
      %v1676 = vadd.f32 %v1674, %v1675
      %s1677 = vtos %v1676
      %v1678 = vmul.f32 %v1654, %v1654
      %v1679 = vmul.f32 %v1655, %v1655
      %v1680 = vmul.f32 %v1656, %v1656
      %v1681 = vmul.f32 %v1657, %v1657
      %v1682 = vsel %vm367, %v1678, 0.0
      %v1683 = vsel %vm367, %v1679, 0.0
      %v1684 = vadd.f32 %v1682, %v1683
      %v1685 = vsel %vm367, %v1680, 0.0
      %v1686 = vadd.f32 %v1684, %v1685
      %v1687 = vsel %vm367, %v1681, 0.0
      %v1688 = vadd.f32 %v1686, %v1687
      %1689 = vadd.xlane.f32.xlu0 %v1688
      %v1690 = vpop.xlane.xlu0 %1689
      %v1691 = vrot.slane %v1690, 4
      %v1692 = vadd.f32 %v1690, %v1691
      %v1693 = vrot.slane %v1692, 2
      %v1694 = vadd.f32 %v1692, %v1693
      %v1695 = vrot.slane %v1694, 1
      %v1696 = vadd.f32 %v1694, %v1695
      %s1697 = vtos %v1696
      %v1698 = vstv %s1677
      %v1699 = vadd.f32 %v1698, 0.0
      %1700 = vst [vmem:[%s326] sm:$0xff] %v1699
      %v1701 = vstv %s1697
      %v1702 = vadd.f32 %v1701, 0.0
      %s1703 = scalar_lea.vmem %s326, 8
      %1704 = vst [vmem:[%s1703] sm:$0xff] %v1702
      %s1705 = smul.u32 2, %s20
      %p1706 = scmp.lt.s32.totalorder %s1705, 3
      %s1707 = scalar_select %p1706, %s1705, 3
      %s1708 = smul.addr %s1707, 2
      %s1709 = smul.addr %s1708, 8
      %s1710 = scalar_lea.vmem %s7, %s1709
      %p1711 = scmp.lt.s32.totalorder %s20, 1
      %s1712 = scalar_select %p1711, %s20, 1
      %s1713 = smul.addr %s1712, 2
      %s1714 = smul.addr %s1713, 8
      %s1715 = scalar_lea.vmem %s8, %s1714
      // Predicated region
      $region49: #{enc_inter_cnn2int_forward.2} parent=47 // pred_check
        %p1716 = pneg %p190
      $region50: #{enc_inter_cnn2int_forward.2} parent=47 // pred_check_branch
        %1718 = sbr.rel (%p1716) target = $region52
      $region51: #{enc_inter_cnn2int_forward.2} parent=47 // pred_region
        %s1719 = smul.u32 2, %s20
      $region52: #{enc_inter_cnn2int_forward.2} parent=47 // pred_fallthru
        _
      // Predicated region
      $region53: #{enc_inter_cnn2int_forward.2} parent=47 // pred_check
        %p1720 = pneg %p216
      $region54: #{enc_inter_cnn2int_forward.2} parent=47 // pred_check_branch
        %1722 = sbr.rel (%p1720) target = $region56
      $region55: #{enc_inter_cnn2int_forward.2} parent=47 // pred_region
        _
      $region56: #{enc_inter_cnn2int_forward.2} parent=47 // pred_fallthru
        _
    $region48: #{enc_inter_cnn2int_forward.2} parent=5 // pred_fallthru
      _
    %p1723 = scmp.le.s32.totalorder 2, %s15
    // Predicated region
    $region57: #{enc_inter_cnn2int_forward.2} parent=5 // pred_check
      %p1724 = pneg %p1723
    $region58: #{enc_inter_cnn2int_forward.2} parent=5 // pred_check_branch
      %1726 = sbr.rel (%p1724) target = $region60
    $region59: #{enc_inter_cnn2int_forward.2} parent=5 // pred_region
      %s1727 = ssub.s32 %s15, 2
      // Predicated region
      $region61: #{enc_inter_cnn2int_forward.2} parent=59 // pred_check
        %p1728 = pneg %p196
      $region62: #{enc_inter_cnn2int_forward.2} parent=59 // pred_check_branch
        %1730 = sbr.rel (%p1728) target = $region64
      $region63: #{enc_inter_cnn2int_forward.2} parent=59 // pred_region
        %s1731 = smul.u32 2, %s21
        %p1732 = scmp.lt.s32.totalorder %s1731, 3
        %s1733 = scalar_select %p1732, %s1731, 3
        %s1734 = smul.addr %s1733, 2
        %s1735 = smul.addr %s1734, 8
        %s1736 = scalar_lea.vmem %s7, %s1735
      $region64: #{enc_inter_cnn2int_forward.2} parent=59 // pred_fallthru
        _
      // Predicated region
      $region65: #{enc_inter_cnn2int_forward.2} parent=59 // pred_check
        %p1737 = pneg %p222
      $region66: #{enc_inter_cnn2int_forward.2} parent=59 // pred_check_branch
        %1739 = sbr.rel (%p1737) target = $region68
      $region67: #{enc_inter_cnn2int_forward.2} parent=59 // pred_region
        %p1740 = scmp.lt.s32.totalorder %s21, 1
        %s1741 = scalar_select %p1740, %s21, 1
        %s1742 = smul.addr %s1741, 2
        %s1743 = smul.addr %s1742, 8
        %s1744 = scalar_lea.vmem %s8, %s1743
      $region68: #{enc_inter_cnn2int_forward.2} parent=59 // pred_fallthru
        _
    $region60: #{enc_inter_cnn2int_forward.2} parent=5 // pred_fallthru
      _
  $region6: #{enc_inter_cnn2int_forward.2} parent=0 // loop_footer
    %s19 = sadd.s32 1, %s15
  $region7: #{enc_inter_cnn2int_forward.2} parent=0 // loop_footer_branch
    %14 = sbr.rel target = $region3
  $region8: #{enc_inter_cnn2int_forward.2} parent=0 // loop_exit
    _

</llo_original>
